<compile_context>
chip_gen: v7x
topology: tpu7x:2x2x1
jax: 0.10.0
libtpu: 0.0.40
codegen_flags: <defaults>
</compile_context>

<pallas_src>
import math

import jax
import jax.numpy as jnp
from jax import lax
from jax.experimental import pallas as pl
from jax.experimental.pallas import tpu as pltpu

MODEL_DIM = 64
NUM_HEADS = 8
HEAD_DIM = MODEL_DIM // NUM_HEADS
LN_EPS = 1e-5


def _ln_normalize(x):
    mu = jnp.mean(x, axis=-1, keepdims=True)
    var = jnp.mean((x - mu) ** 2, axis=-1, keepdims=True)
    return (x - mu) * lax.rsqrt(var + LN_EPS)


def _layernorm(x, gamma, beta):
    return _ln_normalize(x) * gamma + beta


def _gelu_exact(x):
    # exact (erf-based) GELU, matching torch.nn.GELU() default
    return 0.5 * x * (1.0 + lax.erf(x * (1.0 / math.sqrt(2.0))))


def vit_block_kernel(x_ref,
                     wqkv_ref, bqkv_ref,
                     wo_ref, bo_ref,
                     w1_ref, bb1_ref,
                     w2_ref, bb2_ref,
                     o_ref):
    Bt, S, D = x_ref.shape
    H, Dh = NUM_HEADS, HEAD_DIM
    bf16 = jnp.bfloat16

    # rows ordered (batch, seq); residual stream kept in f32 throughout
    x = x_ref[...].astype(jnp.float32).reshape(Bt * S, D)                # (R, D)

    # ---- LayerNorm 1 (gamma/beta pre-folded into wqkv/bqkv in the wrapper) ----
    x1 = _ln_normalize(x)

    # ---- fused QKV projection: bf16 operands, f32 accumulation ----
    qkv = jnp.dot(x1.astype(bf16), wqkv_ref[...],
                  preferred_element_type=jnp.float32) + bqkv_ref[...]    # (R, 3D)

    # ---- group per (head, batch): (R, D) -> (G = H*Bt, S, Dh) ----
    # Kept as static lane slices + leading-dim concat (proven to lower at Dh=8).
    # TODO(synk): lane-dense block-diagonal scores / flash-style kv tiling for
    # production sequence lengths.
    def to_groups(m):
        m3 = m.reshape(Bt, S, D)
        return jnp.concatenate(
            [m3[..., h * Dh:(h + 1) * Dh] for h in range(H)], axis=0)

    scale = 1.0 / math.sqrt(Dh)
    q = (to_groups(qkv[:, 0 * D:1 * D]) * scale).astype(bf16)
    k = to_groups(qkv[:, 1 * D:2 * D]).astype(bf16)
    v = to_groups(qkv[:, 2 * D:3 * D]).astype(bf16)

    # ---- attention: ONE leading-batch contraction over all (head, batch) ----
    s = jnp.einsum('gsd,gtd->gst', q, k,
                   preferred_element_type=jnp.float32)                   # (G,S,S) f32
    s = s - jnp.max(s, axis=-1, keepdims=True)
    p = jnp.exp(s)
    # EUP reciprocal instead of a VPU divide
    p = p * pl.reciprocal(jnp.sum(p, axis=-1, keepdims=True), approx=True)
    ctx = jnp.einsum('gst,gtd->gsd', p.astype(bf16), v,
                     preferred_element_type=jnp.float32)                 # (G,S,Dh)

    # regroup heads back onto the feature axis: (G,S,Dh) -> (Bt,S,D) -> (R,D)
    attn = jnp.concatenate(
        [ctx[h * Bt:(h + 1) * Bt] for h in range(H)], axis=-1).reshape(Bt * S, D)
    attn = jnp.dot(attn.astype(bf16), wo_ref[...],
                   preferred_element_type=jnp.float32) + bo_ref[...]

    x = x + attn                                                         # residual 1

    # ---- LayerNorm 2 + MLP (gamma/beta folded into w1/bb1); Dropout = eval ----
    x3 = _ln_normalize(x)
    h1 = jnp.dot(x3.astype(bf16), w1_ref[...],
                 preferred_element_type=jnp.float32) + bb1_ref[...]
    h1 = _gelu_exact(h1)
    h2 = jnp.dot(h1.astype(bf16), w2_ref[...],
                 preferred_element_type=jnp.float32) + bb2_ref[...]

    y = (x + h2).reshape(Bt, S, D)                                       # residual 2
    # TODO(synk): lane-dense (bt, S*D) packed store once the (R,64)->(bt,S*D)
    # relayout is validated on hardware (last-dim-64 stores are masked vst.msk).
    o_ref[...] = y.astype(o_ref.dtype)


# ---------------------------------------------------------------------------
# Tiling / wrapper
# ---------------------------------------------------------------------------

def _per_batch_elem_vmem_bytes(S, D, H):
    """Rough upper bound of live f32 temporaries per batch element per step."""
    f32 = 4
    row_slab = S * D * f32
    n_row_slabs = 16                    # x, x1, qkv(3), q/k/v(3), ctx, attn, x3, h1, h2, y + slack
    scores = 2 * H * S * S * f32        # s and p
    io = 2 * 2 * row_slab               # double-buffered input + output blocks
    return n_row_slabs * row_slab + scores + io


def _vmem_budget_bytes():
    # Per-step temporary budget.  Conservative default that fits v7x's 64 MiB
    # VMEM/TC (v5e/v6e have 128 MiB); best-effort query of the actual chip.
    budget = 24 << 20
    try:
        cap = int(pltpu.get_tpu_info().vmem_capacity_bytes)
        budget = max(budget, cap * 2 // 5)
    except Exception:
        pass
    return budget


def _pick_block_batch(B, S, D, H, *, min_rows_per_core=256):
    """Batch elements per grid step.

    Largest divisor of B that fits the VMEM temporary budget (big tiles
    amortize the ~0.35 us/step pipeline overhead and make every (R, D)
    projection matmul taller).  v5e/v6e have one TensorCore so the grid is a
    serial loop and a single step is best; only split into >=2 grid steps (so
    "parallel" can shard across v7x's two TensorCores) when each step still
    keeps >= min_rows_per_core rows.
    """
    per_b = _per_batch_elem_vmem_bytes(S, D, H)
    cap = max(1, _vmem_budget_bytes() // per_b)
    divisors = [d for d in range(1, B + 1) if B % d == 0 and d <= cap]
    bt = max(divisors) if divisors else 1
    if B // bt == 1:
        split = [d for d in divisors if B // d >= 2 and d * S >= min_rows_per_core]
        if split:
            bt = max(split)
    return bt


def _cost_estimate(B, S, D, H):
    R = B * S
    mm_flops = 2 * R * D * (3 * D + D + D + D)        # qkv, out-proj, mlp1, mlp2
    attn_flops = 4 * B * H * S * S * (D // H)         # scores + context
    flops = mm_flops + attn_flops + 40 * R * D        # + LN / softmax / residual
    transc = B * H * S * S + R * D + 4 * R            # exp, erf, rsqrt, recip
    bytes_accessed = (2 * R * D * 4                   # x in + out (f32)
                      + 2 * (D * 3 * D + 3 * D * D)   # bf16 weights
                      + 4 * (3 * D + 3 * D))          # f32 biases
    return pl.CostEstimate(flops=int(flops), transcendentals=int(transc),
                           bytes_accessed=int(bytes_accessed))


def _fold_params(params):
    """Fold LN gammas/betas into the following matmuls; cast weights to bf16."""
    (g1, b1, wqkv, bqkv, wo, bo, g2, b2, w1, bb1, w2, bb2) = params
    D = MODEL_DIM
    f32, bf16 = jnp.float32, jnp.bfloat16
    wqkv_f = (g1.reshape(D, 1) * wqkv).astype(bf16)
    bqkv_f = (b1 @ wqkv + bqkv).astype(f32)
    w1_f = (g2.reshape(D, 1) * w1).astype(bf16)
    bb1_f = (b2 @ w1 + bb1).astype(f32)
    return (wqkv_f, bqkv_f,
            wo.astype(bf16), bo.astype(f32),
            w1_f, bb1_f,
            w2.astype(bf16), bb2.astype(f32))


def vit_block(x_sbd, params, *, block_batch=None):
    """x_sbd: (S, B, D), PyTorch nn.MultiheadAttention's default layout."""
    S, B, D = x_sbd.shape
    assert D == MODEL_DIM
    bt = block_batch if block_batch is not None else _pick_block_batch(B, S, D, NUM_HEADS)
    assert B % bt == 0

    x = jnp.transpose(x_sbd, (1, 0, 2))                                  # (B, S, D)
    kp = _fold_params(params)

    def const2d(a):
        # full-array block, constant index -> fetched into VMEM once, no re-DMA
        return pl.BlockSpec(a.shape, lambda i: (0, 0))

    grid_spec = pltpu.PrefetchScalarGridSpec(
        num_scalar_prefetch=0,
        grid=(B // bt,),
        in_specs=[pl.BlockSpec((bt, S, D), lambda i: (i, 0, 0))]
                 + [const2d(a) for a in kp],
        out_specs=pl.BlockSpec((bt, S, D), lambda i: (i, 0, 0)),
    )

    per_b = _per_batch_elem_vmem_bytes(S, D, NUM_HEADS)
    vmem_limit = int(min(64 << 20, max(32 << 20, 2 * bt * per_b)))

    out = pl.pallas_call(
        vit_block_kernel,
        out_shape=jax.ShapeDtypeStruct((B, S, D), x.dtype),
        grid_spec=grid_spec,
        compiler_params=pltpu.CompilerParams(
            dimension_semantics=("parallel",),
            vmem_limit_bytes=vmem_limit),
        cost_estimate=_cost_estimate(B, S, D, NUM_HEADS),
    )(x, *kp)

    return jnp.transpose(out, (1, 0, 2))                                 # (S, B, D)


# ---------------------------------------------------------------------------
# Params + pure-JAX reference (mirrors the PyTorch VITblock forward, eval mode)
# ---------------------------------------------------------------------------

def init_params(key):
    ks = jax.random.split(key, 6)
    s = 0.05
    D = MODEL_DIM
    g1 = jnp.ones((1, D), jnp.float32)
    b1 = jnp.zeros((1, D), jnp.float32)
    g2 = jnp.ones((1, D), jnp.float32)
    b2 = jnp.zeros((1, D), jnp.float32)
    # attention projections, stored as (in, out) so the kernel does x @ W
    wqkv = s * jax.random.normal(ks[0], (D, 3 * D), jnp.float32)
    bqkv = s * jax.random.normal(ks[1], (1, 3 * D), jnp.float32)
    wo = s * jax.random.normal(ks[2], (D, D), jnp.float32)
    bo = s * jax.random.normal(ks[3], (1, D), jnp.float32)
    # MLP (hidden width = D, matching the PyTorch module's Linear(64, 64))
    w1 = s * jax.random.normal(ks[4], (D, D), jnp.float32)
    bb1 = jnp.zeros((1, D), jnp.float32)
    w2 = s * jax.random.normal(ks[5], (D, D), jnp.float32)
    bb2 = jnp.zeros((1, D), jnp.float32)
    return (g1, b1, wqkv, bqkv, wo, bo, g2, b2, w1, bb1, w2, bb2)


def vit_block_ref(x_sbd, params):
    (g1, b1, wqkv, bqkv, wo, bo, g2, b2, w1, bb1, w2, bb2) = params
    x = jnp.transpose(x_sbd, (1, 0, 2)).astype(jnp.float32)              # (B, S, D)
    x1 = _layernorm(x, g1, b1)
    qkv = x1 @ wqkv + bqkv
    D = MODEL_DIM
    q, k, v = qkv[..., :D], qkv[..., D:2 * D], qkv[..., 2 * D:]
    B, S, _ = x.shape
    qh = q.reshape(B, S, NUM_HEADS, HEAD_DIM)
    kh = k.reshape(B, S, NUM_HEADS, HEAD_DIM)
    vh = v.reshape(B, S, NUM_HEADS, HEAD_DIM)
    s = jnp.einsum("bqhd,bkhd->bhqk", qh, kh) / math.sqrt(HEAD_DIM)
    p = jax.nn.softmax(s, axis=-1)
    attn = jnp.einsum("bhqk,bkhd->bqhd", p, vh).reshape(B, S, D)
    attn = attn @ wo + bo
    x = x + attn
    x3 = _layernorm(x, g2, b2)
    h = _gelu_exact(x3 @ w1 + bb1)
    x = x + (h @ w2 + bb2)
    return jnp.transpose(x, (1, 0, 2))


if __name__ == "__main__":
    key = jax.random.PRNGKey(0)
    k_x, k_p = jax.random.split(key)

    S, B, D = 8, 2, MODEL_DIM                 # (seq, batch, model_dim)
    x = jax.random.normal(k_x, (S, B, D), jnp.float32)
    params = init_params(k_p)

    out = jax.block_until_ready(vit_block(x, params))
    ref = vit_block_ref(x, params)

    assert out.shape == (S, B, D)
    max_err = float(jnp.max(jnp.abs(out - ref)))
    # tolerance covers bf16 MXU operands (f32 accumulation) + EUP approx recip
    assert jnp.allclose(out, ref, rtol=1e-2, atol=1e-2), \
        f"mismatch vs reference (max abs err {max_err})"

    print("KERNEL_OK")
</pallas_src>

<mosaic_0001>
module attributes {stable_mosaic.version = 11 : i64} {
  func.func @vit_block_kernel(%arg0: i32, %arg1: memref<2x8x64xf32, #tpu.memory_space<vmem>>, %arg2: memref<64x192xbf16, #tpu.memory_space<vmem>>, %arg3: memref<1x192xf32, #tpu.memory_space<vmem>>, %arg4: memref<64x64xbf16, #tpu.memory_space<vmem>>, %arg5: memref<1x64xf32, #tpu.memory_space<vmem>>, %arg6: memref<64x64xbf16, #tpu.memory_space<vmem>>, %arg7: memref<1x64xf32, #tpu.memory_space<vmem>>, %arg8: memref<64x64xbf16, #tpu.memory_space<vmem>>, %arg9: memref<1x64xf32, #tpu.memory_space<vmem>>, %arg10: memref<2x8x64xf32, #tpu.memory_space<vmem>>) attributes {dimension_semantics = [#tpu.dimension_semantics<parallel>], iteration_bounds = array<i64: 1>, scalar_prefetch = 0 : i64, scratch_operands = 0 : i64, tpu.core_type = #tpu.core_type<tc>, window_params = [{transform_indices = @transform_0, window_bounds = array<i64: 2, 8, 64>}, {pipeline_mode = #tpu.pipeline_mode<synchronous>, transform_indices = @transform_1, window_bounds = array<i64: 64, 192>}, {pipeline_mode = #tpu.pipeline_mode<synchronous>, transform_indices = @transform_2, window_bounds = array<i64: 1, 192>}, {pipeline_mode = #tpu.pipeline_mode<synchronous>, transform_indices = @transform_3, window_bounds = array<i64: 64, 64>}, {pipeline_mode = #tpu.pipeline_mode<synchronous>, transform_indices = @transform_4, window_bounds = array<i64: 1, 64>}, {pipeline_mode = #tpu.pipeline_mode<synchronous>, transform_indices = @transform_5, window_bounds = array<i64: 64, 64>}, {pipeline_mode = #tpu.pipeline_mode<synchronous>, transform_indices = @transform_6, window_bounds = array<i64: 1, 64>}, {pipeline_mode = #tpu.pipeline_mode<synchronous>, transform_indices = @transform_7, window_bounds = array<i64: 64, 64>}, {pipeline_mode = #tpu.pipeline_mode<synchronous>, transform_indices = @transform_8, window_bounds = array<i64: 1, 64>}, {transform_indices = @transform_9, window_bounds = array<i64: 2, 8, 64>}]} {
    %c0 = arith.constant 0 : index
    %c0_0 = arith.constant 0 : index
    %c0_1 = arith.constant 0 : index
    %0 = vector.load %arg1[%c0, %c0_0, %c0_1] : memref<2x8x64xf32, #tpu.memory_space<vmem>>, vector<2x8x64xf32>
    %1 = vector.shape_cast %0 : vector<2x8x64xf32> to vector<16x64xf32>
    %cst = arith.constant dense<0.000000e+00> : vector<16xf32>
    %2 = vector.multi_reduction <add>, %1, %cst [1] : vector<16x64xf32> to vector<16xf32>
    %3 = vector.shape_cast %2 : vector<16xf32> to vector<16x1xf32>
    %cst_2 = arith.constant 6.400000e+01 : f32
    %4 = vector.broadcast %cst_2 : f32 to vector<16x1xf32>
    %5 = arith.divf %3, %4 : vector<16x1xf32>
    %6 = vector.broadcast %5 : vector<16x1xf32> to vector<16x64xf32>
    %7 = arith.subf %1, %6 : vector<16x64xf32>
    %8 = arith.mulf %7, %7 : vector<16x64xf32>
    %cst_3 = arith.constant dense<0.000000e+00> : vector<16xf32>
    %9 = vector.multi_reduction <add>, %8, %cst_3 [1] : vector<16x64xf32> to vector<16xf32>
    %10 = vector.shape_cast %9 : vector<16xf32> to vector<16x1xf32>
    %cst_4 = arith.constant 6.400000e+01 : f32
    %11 = vector.broadcast %cst_4 : f32 to vector<16x1xf32>
    %12 = arith.divf %10, %11 : vector<16x1xf32>
    %13 = vector.broadcast %5 : vector<16x1xf32> to vector<16x64xf32>
    %14 = arith.subf %1, %13 : vector<16x64xf32>
    %cst_5 = arith.constant 9.99999974E-6 : f32
    %15 = vector.broadcast %cst_5 : f32 to vector<16x1xf32>
    %16 = arith.addf %12, %15 : vector<16x1xf32>
    %17 = math.rsqrt %16 : vector<16x1xf32>
    %18 = vector.broadcast %17 : vector<16x1xf32> to vector<16x64xf32>
    %19 = arith.mulf %14, %18 : vector<16x64xf32>
    %20 = arith.truncf %19 : vector<16x64xf32> to vector<16x64xbf16>
    %c0_6 = arith.constant 0 : index
    %c0_7 = arith.constant 0 : index
    %21 = vector.load %arg2[%c0_6, %c0_7] : memref<64x192xbf16, #tpu.memory_space<vmem>>, vector<64x192xbf16>
    %cst_8 = arith.constant dense<0.000000e+00> : vector<16x192xf32>
    %22 = tpu.matmul %20, %21, %cst_8 {dimension_numbers = #tpu.dot_dimension_numbers<[1], [0], [0], [1], [0, 0, 1, 1], [], []>} : vector<16x64xbf16>, vector<64x192xbf16>, vector<16x192xf32> -> vector<16x192xf32>
    %c0_9 = arith.constant 0 : index
    %c0_10 = arith.constant 0 : index
    %23 = vector.load %arg3[%c0_9, %c0_10] : memref<1x192xf32, #tpu.memory_space<vmem>>, vector<1x192xf32>
    %24 = vector.broadcast %23 : vector<1x192xf32> to vector<16x192xf32>
    %25 = arith.addf %22, %24 : vector<16x192xf32>
    %26 = vector.extract_strided_slice %25 {offsets = [0, 0], sizes = [16, 64], strides = [1, 1]} : vector<16x192xf32> to vector<16x64xf32>
    %27 = vector.shape_cast %26 : vector<16x64xf32> to vector<2x8x64xf32>
    %28 = vector.extract_strided_slice %27 {offsets = [0, 0, 0], sizes = [2, 8, 8], strides = [1, 1, 1]} : vector<2x8x64xf32> to vector<2x8x8xf32>
    %29 = vector.extract_strided_slice %27 {offsets = [0, 0, 8], sizes = [2, 8, 8], strides = [1, 1, 1]} : vector<2x8x64xf32> to vector<2x8x8xf32>
    %30 = vector.extract_strided_slice %27 {offsets = [0, 0, 16], sizes = [2, 8, 8], strides = [1, 1, 1]} : vector<2x8x64xf32> to vector<2x8x8xf32>
    %31 = vector.extract_strided_slice %27 {offsets = [0, 0, 24], sizes = [2, 8, 8], strides = [1, 1, 1]} : vector<2x8x64xf32> to vector<2x8x8xf32>
    %32 = vector.extract_strided_slice %27 {offsets = [0, 0, 32], sizes = [2, 8, 8], strides = [1, 1, 1]} : vector<2x8x64xf32> to vector<2x8x8xf32>
    %33 = vector.extract_strided_slice %27 {offsets = [0, 0, 40], sizes = [2, 8, 8], strides = [1, 1, 1]} : vector<2x8x64xf32> to vector<2x8x8xf32>
    %34 = vector.extract_strided_slice %27 {offsets = [0, 0, 48], sizes = [2, 8, 8], strides = [1, 1, 1]} : vector<2x8x64xf32> to vector<2x8x8xf32>
    %35 = vector.extract_strided_slice %27 {offsets = [0, 0, 56], sizes = [2, 8, 8], strides = [1, 1, 1]} : vector<2x8x64xf32> to vector<2x8x8xf32>
    %36 = tpu.concatenate %28, %29, %30, %31, %32, %33, %34, %35 in 0 : vector<2x8x8xf32>, vector<2x8x8xf32>, vector<2x8x8xf32>, vector<2x8x8xf32>, vector<2x8x8xf32>, vector<2x8x8xf32>, vector<2x8x8xf32>, vector<2x8x8xf32> -> vector<16x8x8xf32>
    %cst_11 = arith.constant 0.353553385 : f32
    %37 = vector.broadcast %cst_11 : f32 to vector<16x8x8xf32>
    %38 = arith.mulf %36, %37 : vector<16x8x8xf32>
    %39 = arith.truncf %38 : vector<16x8x8xf32> to vector<16x8x8xbf16>
    %40 = vector.extract_strided_slice %25 {offsets = [0, 64], sizes = [16, 64], strides = [1, 1]} : vector<16x192xf32> to vector<16x64xf32>
    %41 = vector.shape_cast %40 : vector<16x64xf32> to vector<2x8x64xf32>
    %42 = vector.extract_strided_slice %41 {offsets = [0, 0, 0], sizes = [2, 8, 8], strides = [1, 1, 1]} : vector<2x8x64xf32> to vector<2x8x8xf32>
    %43 = vector.extract_strided_slice %41 {offsets = [0, 0, 8], sizes = [2, 8, 8], strides = [1, 1, 1]} : vector<2x8x64xf32> to vector<2x8x8xf32>
    %44 = vector.extract_strided_slice %41 {offsets = [0, 0, 16], sizes = [2, 8, 8], strides = [1, 1, 1]} : vector<2x8x64xf32> to vector<2x8x8xf32>
    %45 = vector.extract_strided_slice %41 {offsets = [0, 0, 24], sizes = [2, 8, 8], strides = [1, 1, 1]} : vector<2x8x64xf32> to vector<2x8x8xf32>
    %46 = vector.extract_strided_slice %41 {offsets = [0, 0, 32], sizes = [2, 8, 8], strides = [1, 1, 1]} : vector<2x8x64xf32> to vector<2x8x8xf32>
    %47 = vector.extract_strided_slice %41 {offsets = [0, 0, 40], sizes = [2, 8, 8], strides = [1, 1, 1]} : vector<2x8x64xf32> to vector<2x8x8xf32>
    %48 = vector.extract_strided_slice %41 {offsets = [0, 0, 48], sizes = [2, 8, 8], strides = [1, 1, 1]} : vector<2x8x64xf32> to vector<2x8x8xf32>
    %49 = vector.extract_strided_slice %41 {offsets = [0, 0, 56], sizes = [2, 8, 8], strides = [1, 1, 1]} : vector<2x8x64xf32> to vector<2x8x8xf32>
    %50 = tpu.concatenate %42, %43, %44, %45, %46, %47, %48, %49 in 0 : vector<2x8x8xf32>, vector<2x8x8xf32>, vector<2x8x8xf32>, vector<2x8x8xf32>, vector<2x8x8xf32>, vector<2x8x8xf32>, vector<2x8x8xf32>, vector<2x8x8xf32> -> vector<16x8x8xf32>
    %51 = arith.truncf %50 : vector<16x8x8xf32> to vector<16x8x8xbf16>
    %52 = vector.extract_strided_slice %25 {offsets = [0, 128], sizes = [16, 64], strides = [1, 1]} : vector<16x192xf32> to vector<16x64xf32>
    %53 = vector.shape_cast %52 : vector<16x64xf32> to vector<2x8x64xf32>
    %54 = vector.extract_strided_slice %53 {offsets = [0, 0, 0], sizes = [2, 8, 8], strides = [1, 1, 1]} : vector<2x8x64xf32> to vector<2x8x8xf32>
    %55 = vector.extract_strided_slice %53 {offsets = [0, 0, 8], sizes = [2, 8, 8], strides = [1, 1, 1]} : vector<2x8x64xf32> to vector<2x8x8xf32>
    %56 = vector.extract_strided_slice %53 {offsets = [0, 0, 16], sizes = [2, 8, 8], strides = [1, 1, 1]} : vector<2x8x64xf32> to vector<2x8x8xf32>
    %57 = vector.extract_strided_slice %53 {offsets = [0, 0, 24], sizes = [2, 8, 8], strides = [1, 1, 1]} : vector<2x8x64xf32> to vector<2x8x8xf32>
    %58 = vector.extract_strided_slice %53 {offsets = [0, 0, 32], sizes = [2, 8, 8], strides = [1, 1, 1]} : vector<2x8x64xf32> to vector<2x8x8xf32>
    %59 = vector.extract_strided_slice %53 {offsets = [0, 0, 40], sizes = [2, 8, 8], strides = [1, 1, 1]} : vector<2x8x64xf32> to vector<2x8x8xf32>
    %60 = vector.extract_strided_slice %53 {offsets = [0, 0, 48], sizes = [2, 8, 8], strides = [1, 1, 1]} : vector<2x8x64xf32> to vector<2x8x8xf32>
    %61 = vector.extract_strided_slice %53 {offsets = [0, 0, 56], sizes = [2, 8, 8], strides = [1, 1, 1]} : vector<2x8x64xf32> to vector<2x8x8xf32>
    %62 = tpu.concatenate %54, %55, %56, %57, %58, %59, %60, %61 in 0 : vector<2x8x8xf32>, vector<2x8x8xf32>, vector<2x8x8xf32>, vector<2x8x8xf32>, vector<2x8x8xf32>, vector<2x8x8xf32>, vector<2x8x8xf32>, vector<2x8x8xf32> -> vector<16x8x8xf32>
    %63 = arith.truncf %62 : vector<16x8x8xf32> to vector<16x8x8xbf16>
    "tpu.trace_start"() <{level = 10 : i32, message = "gsd,gtd->gst"}> : () -> ()
    %cst_12 = arith.constant dense<0.000000e+00> : vector<16x8x8xf32>
    %64 = tpu.matmul %39, %51, %cst_12 {dimension_numbers = #tpu.dot_dimension_numbers<[2], [2], [1], [1], [0, 0, 0, 1, 1, 1], [0], [0]>} : vector<16x8x8xbf16>, vector<16x8x8xbf16>, vector<16x8x8xf32> -> vector<16x8x8xf32>
    "tpu.trace_stop"() : () -> ()
    %cst_13 = arith.constant dense<0xFF800000> : vector<16x8xf32>
    %65 = vector.multi_reduction <maximumf>, %64, %cst_13 [2] : vector<16x8x8xf32> to vector<16x8xf32>
    %66 = vector.shape_cast %65 : vector<16x8xf32> to vector<16x8x1xf32>
    %67 = vector.broadcast %66 : vector<16x8x1xf32> to vector<16x8x8xf32>
    %68 = arith.subf %64, %67 : vector<16x8x8xf32>
    %69 = math.exp %68 : vector<16x8x8xf32>
    %cst_14 = arith.constant dense<0.000000e+00> : vector<16x8xf32>
    %70 = vector.multi_reduction <add>, %69, %cst_14 [2] : vector<16x8x8xf32> to vector<16x8xf32>
    %71 = vector.shape_cast %70 : vector<16x8xf32> to vector<16x8x1xf32>
    %72 = tpu.reciprocal %71 {approx = true} : vector<16x8x1xf32> -> vector<16x8x1xf32>
    %73 = vector.broadcast %72 : vector<16x8x1xf32> to vector<16x8x8xf32>
    %74 = arith.mulf %69, %73 : vector<16x8x8xf32>
    %75 = arith.truncf %74 : vector<16x8x8xf32> to vector<16x8x8xbf16>
    "tpu.trace_start"() <{level = 10 : i32, message = "gst,gtd->gsd"}> : () -> ()
    %cst_15 = arith.constant dense<0.000000e+00> : vector<16x8x8xf32>
    %76 = tpu.matmul %75, %63, %cst_15 {dimension_numbers = #tpu.dot_dimension_numbers<[2], [1], [1], [2], [0, 0, 0, 1, 1, 2], [0], [0]>} : vector<16x8x8xbf16>, vector<16x8x8xbf16>, vector<16x8x8xf32> -> vector<16x8x8xf32>
    "tpu.trace_stop"() : () -> ()
    %77 = vector.extract_strided_slice %76 {offsets = [0, 0, 0], sizes = [2, 8, 8], strides = [1, 1, 1]} : vector<16x8x8xf32> to vector<2x8x8xf32>
    %78 = vector.extract_strided_slice %76 {offsets = [2, 0, 0], sizes = [2, 8, 8], strides = [1, 1, 1]} : vector<16x8x8xf32> to vector<2x8x8xf32>
    %79 = vector.extract_strided_slice %76 {offsets = [4, 0, 0], sizes = [2, 8, 8], strides = [1, 1, 1]} : vector<16x8x8xf32> to vector<2x8x8xf32>
    %80 = vector.extract_strided_slice %76 {offsets = [6, 0, 0], sizes = [2, 8, 8], strides = [1, 1, 1]} : vector<16x8x8xf32> to vector<2x8x8xf32>
    %81 = vector.extract_strided_slice %76 {offsets = [8, 0, 0], sizes = [2, 8, 8], strides = [1, 1, 1]} : vector<16x8x8xf32> to vector<2x8x8xf32>
    %82 = vector.extract_strided_slice %76 {offsets = [10, 0, 0], sizes = [2, 8, 8], strides = [1, 1, 1]} : vector<16x8x8xf32> to vector<2x8x8xf32>
    %83 = vector.extract_strided_slice %76 {offsets = [12, 0, 0], sizes = [2, 8, 8], strides = [1, 1, 1]} : vector<16x8x8xf32> to vector<2x8x8xf32>
    %84 = vector.extract_strided_slice %76 {offsets = [14, 0, 0], sizes = [2, 8, 8], strides = [1, 1, 1]} : vector<16x8x8xf32> to vector<2x8x8xf32>
    %85 = tpu.concatenate %77, %78, %79, %80, %81, %82, %83, %84 in 2 : vector<2x8x8xf32>, vector<2x8x8xf32>, vector<2x8x8xf32>, vector<2x8x8xf32>, vector<2x8x8xf32>, vector<2x8x8xf32>, vector<2x8x8xf32>, vector<2x8x8xf32> -> vector<2x8x64xf32>
    %86 = vector.shape_cast %85 : vector<2x8x64xf32> to vector<16x64xf32>
    %87 = arith.truncf %86 : vector<16x64xf32> to vector<16x64xbf16>
    %c0_16 = arith.constant 0 : index
    %c0_17 = arith.constant 0 : index
    %88 = vector.load %arg4[%c0_16, %c0_17] : memref<64x64xbf16, #tpu.memory_space<vmem>>, vector<64x64xbf16>
    %cst_18 = arith.constant dense<0.000000e+00> : vector<16x64xf32>
    %89 = tpu.matmul %87, %88, %cst_18 {dimension_numbers = #tpu.dot_dimension_numbers<[1], [0], [0], [1], [0, 0, 1, 1], [], []>} : vector<16x64xbf16>, vector<64x64xbf16>, vector<16x64xf32> -> vector<16x64xf32>
    %c0_19 = arith.constant 0 : index
    %c0_20 = arith.constant 0 : index
    %90 = vector.load %arg5[%c0_19, %c0_20] : memref<1x64xf32, #tpu.memory_space<vmem>>, vector<1x64xf32>
    %91 = vector.broadcast %90 : vector<1x64xf32> to vector<16x64xf32>
    %92 = arith.addf %89, %91 : vector<16x64xf32>
    %93 = arith.addf %1, %92 : vector<16x64xf32>
    %cst_21 = arith.constant dense<0.000000e+00> : vector<16xf32>
    %94 = vector.multi_reduction <add>, %93, %cst_21 [1] : vector<16x64xf32> to vector<16xf32>
    %95 = vector.shape_cast %94 : vector<16xf32> to vector<16x1xf32>
    %cst_22 = arith.constant 6.400000e+01 : f32
    %96 = vector.broadcast %cst_22 : f32 to vector<16x1xf32>
    %97 = arith.divf %95, %96 : vector<16x1xf32>
    %98 = vector.broadcast %97 : vector<16x1xf32> to vector<16x64xf32>
    %99 = arith.subf %93, %98 : vector<16x64xf32>
    %100 = arith.mulf %99, %99 : vector<16x64xf32>
    %cst_23 = arith.constant dense<0.000000e+00> : vector<16xf32>
    %101 = vector.multi_reduction <add>, %100, %cst_23 [1] : vector<16x64xf32> to vector<16xf32>
    %102 = vector.shape_cast %101 : vector<16xf32> to vector<16x1xf32>
    %cst_24 = arith.constant 6.400000e+01 : f32
    %103 = vector.broadcast %cst_24 : f32 to vector<16x1xf32>
    %104 = arith.divf %102, %103 : vector<16x1xf32>
    %105 = vector.broadcast %97 : vector<16x1xf32> to vector<16x64xf32>
    %106 = arith.subf %93, %105 : vector<16x64xf32>
    %cst_25 = arith.constant 9.99999974E-6 : f32
    %107 = vector.broadcast %cst_25 : f32 to vector<16x1xf32>
    %108 = arith.addf %104, %107 : vector<16x1xf32>
    %109 = math.rsqrt %108 : vector<16x1xf32>
    %110 = vector.broadcast %109 : vector<16x1xf32> to vector<16x64xf32>
    %111 = arith.mulf %106, %110 : vector<16x64xf32>
    %112 = arith.truncf %111 : vector<16x64xf32> to vector<16x64xbf16>
    %c0_26 = arith.constant 0 : index
    %c0_27 = arith.constant 0 : index
    %113 = vector.load %arg6[%c0_26, %c0_27] : memref<64x64xbf16, #tpu.memory_space<vmem>>, vector<64x64xbf16>
    %cst_28 = arith.constant dense<0.000000e+00> : vector<16x64xf32>
    %114 = tpu.matmul %112, %113, %cst_28 {dimension_numbers = #tpu.dot_dimension_numbers<[1], [0], [0], [1], [0, 0, 1, 1], [], []>} : vector<16x64xbf16>, vector<64x64xbf16>, vector<16x64xf32> -> vector<16x64xf32>
    %c0_29 = arith.constant 0 : index
    %c0_30 = arith.constant 0 : index
    %115 = vector.load %arg7[%c0_29, %c0_30] : memref<1x64xf32, #tpu.memory_space<vmem>>, vector<1x64xf32>
    %116 = vector.broadcast %115 : vector<1x64xf32> to vector<16x64xf32>
    %117 = arith.addf %114, %116 : vector<16x64xf32>
    %cst_31 = arith.constant 5.000000e-01 : f32
    %118 = vector.broadcast %cst_31 : f32 to vector<16x64xf32>
    %119 = arith.mulf %118, %117 : vector<16x64xf32>
    %cst_32 = arith.constant 0.707106769 : f32
    %120 = vector.broadcast %cst_32 : f32 to vector<16x64xf32>
    %121 = arith.mulf %117, %120 : vector<16x64xf32>
    %122 = math.erf %121 : vector<16x64xf32>
    %cst_33 = arith.constant 1.000000e+00 : f32
    %123 = vector.broadcast %cst_33 : f32 to vector<16x64xf32>
    %124 = arith.addf %123, %122 : vector<16x64xf32>
    %125 = arith.mulf %119, %124 : vector<16x64xf32>
    %126 = arith.truncf %125 : vector<16x64xf32> to vector<16x64xbf16>
    %c0_34 = arith.constant 0 : index
    %c0_35 = arith.constant 0 : index
    %127 = vector.load %arg8[%c0_34, %c0_35] : memref<64x64xbf16, #tpu.memory_space<vmem>>, vector<64x64xbf16>
    %cst_36 = arith.constant dense<0.000000e+00> : vector<16x64xf32>
    %128 = tpu.matmul %126, %127, %cst_36 {dimension_numbers = #tpu.dot_dimension_numbers<[1], [0], [0], [1], [0, 0, 1, 1], [], []>} : vector<16x64xbf16>, vector<64x64xbf16>, vector<16x64xf32> -> vector<16x64xf32>
    %c0_37 = arith.constant 0 : index
    %c0_38 = arith.constant 0 : index
    %129 = vector.load %arg9[%c0_37, %c0_38] : memref<1x64xf32, #tpu.memory_space<vmem>>, vector<1x64xf32>
    %130 = vector.broadcast %129 : vector<1x64xf32> to vector<16x64xf32>
    %131 = arith.addf %128, %130 : vector<16x64xf32>
    %132 = arith.addf %93, %131 : vector<16x64xf32>
    %133 = vector.shape_cast %132 : vector<16x64xf32> to vector<2x8x64xf32>
    %c0_39 = arith.constant 0 : index
    %c0_40 = arith.constant 0 : index
    %c0_41 = arith.constant 0 : index
    %134 = vector.load %arg10[%c0_39, %c0_40, %c0_41] : memref<2x8x64xf32, #tpu.memory_space<vmem>>, vector<2x8x64xf32>
    tpu.vector_store %arg10[%c0_39, %c0_40, %c0_41], %133 {strides = array<i32>} : memref<2x8x64xf32, #tpu.memory_space<vmem>>, vector<2x8x64xf32>,
    return
  }
  func.func @transform_0(%arg0: i32) -> (i32, i32, i32) {
    %c0_i32 = arith.constant 0 : i32
    %c0_i32_0 = arith.constant 0 : i32
    %c0_i32_1 = arith.constant 0 : i32
    return %arg0, %c0_i32, %c0_i32_0 : i32, i32, i32
  }
  func.func @transform_1(%arg0: i32) -> (i32, i32) {
    %c0_i32 = arith.constant 0 : i32
    %c0_i32_0 = arith.constant 0 : i32
    %c0_i32_1 = arith.constant 0 : i32
    return %c0_i32, %c0_i32_0 : i32, i32
  }
  func.func @transform_2(%arg0: i32) -> (i32, i32) {
    %c0_i32 = arith.constant 0 : i32
    %c0_i32_0 = arith.constant 0 : i32
    %c0_i32_1 = arith.constant 0 : i32
    return %c0_i32, %c0_i32_0 : i32, i32
  }
  func.func @transform_3(%arg0: i32) -> (i32, i32) {
    %c0_i32 = arith.constant 0 : i32
    %c0_i32_0 = arith.constant 0 : i32
    %c0_i32_1 = arith.constant 0 : i32
    return %c0_i32, %c0_i32_0 : i32, i32
  }
  func.func @transform_4(%arg0: i32) -> (i32, i32) {
    %c0_i32 = arith.constant 0 : i32
    %c0_i32_0 = arith.constant 0 : i32
    %c0_i32_1 = arith.constant 0 : i32
    return %c0_i32, %c0_i32_0 : i32, i32
  }
  func.func @transform_5(%arg0: i32) -> (i32, i32) {
    %c0_i32 = arith.constant 0 : i32
    %c0_i32_0 = arith.constant 0 : i32
    %c0_i32_1 = arith.constant 0 : i32
    return %c0_i32, %c0_i32_0 : i32, i32
  }
  func.func @transform_6(%arg0: i32) -> (i32, i32) {
    %c0_i32 = arith.constant 0 : i32
    %c0_i32_0 = arith.constant 0 : i32
    %c0_i32_1 = arith.constant 0 : i32
    return %c0_i32, %c0_i32_0 : i32, i32
  }
  func.func @transform_7(%arg0: i32) -> (i32, i32) {
    %c0_i32 = arith.constant 0 : i32
    %c0_i32_0 = arith.constant 0 : i32
    %c0_i32_1 = arith.constant 0 : i32
    return %c0_i32, %c0_i32_0 : i32, i32
  }
  func.func @transform_8(%arg0: i32) -> (i32, i32) {
    %c0_i32 = arith.constant 0 : i32
    %c0_i32_0 = arith.constant 0 : i32
    %c0_i32_1 = arith.constant 0 : i32
    return %c0_i32, %c0_i32_0 : i32, i32
  }
  func.func @transform_9(%arg0: i32) -> (i32, i32, i32) {
    %c0_i32 = arith.constant 0 : i32
    %c0_i32_0 = arith.constant 0 : i32
    %c0_i32_1 = arith.constant 0 : i32
    return %arg0, %c0_i32, %c0_i32_0 : i32, i32, i32
  }
}

</mosaic_0001>

<llo_original>
// kernel: tpu_custom_call.1
$region0: #{tpu_custom_call.1}
  #allocation0 [shape = 'u32[]', space=smem, size = 0x4, offset = 0x4, fixed_abs, tag = 'smem constant byte address 0x4 - core index']
  #allocation1 [shape = 'u32[144,128]{1,0:T(1,128)}', space=vmem, size = 0x12000, scoped, tag = 'internal scratch']
  %s0 = inlined_call_operand.hbm [shape: f32[2,8,64], index: 0, kind: input, shape index: {}]
  %s1 = inlined_call_operand.hbm [shape: bf16[64,192], index: 1, kind: input, shape index: {}]
  %s2 = inlined_call_operand.vmem [shape: f32[1,192], index: 2, kind: input, shape index: {}]
  %s3 = inlined_call_operand.hbm [shape: bf16[64,64], index: 3, kind: input, shape index: {}]
  %s4 = inlined_call_operand.vmem [shape: f32[1,64], index: 4, kind: input, shape index: {}]
  %s5 = inlined_call_operand.hbm [shape: bf16[64,64], index: 5, kind: input, shape index: {}]
  %s6 = inlined_call_operand.vmem [shape: f32[1,64], index: 6, kind: input, shape index: {}]
  %s7 = inlined_call_operand.hbm [shape: bf16[64,64], index: 7, kind: input, shape index: {}]
  %s8 = inlined_call_operand.vmem [shape: f32[1,64], index: 8, kind: input, shape index: {}]
  %s9 = inlined_call_operand.hbm [shape: f32[2,8,64], index: 9, kind: output, shape index: {}]
  %s10 = sld [smem:[#allocation0]]
  $region66: #{tpu_custom_call.1} parent=0
    _
  %s12 = ssub.s32 1, %s10
  %s13 = scalar_select 0, %s12, %s10
  $region1: #{tpu_custom_call.1} parent=0
    #allocation2 [shape = 'u8[8192]{0}', space=vmem, size = 0x2000, scoped, tag = 'input window, operand 0, single buffered']
    #allocation3 [shape = 's32[1]{0}', space=sflag, size = 0x4, scoped, tag = 'scoped memory for tpu_custom_call.1']
    #allocation4 [shape = 's32[1]{0}', space=sflag, size = 0x4, scoped, tag = 'scoped memory for tpu_custom_call.1']
    #allocation5 [shape = 'u8[32768]{0}', space=vmem, size = 0x8000, scoped, tag = 'input window, operand 1, single buffered']
    #allocation6 [shape = 's32[1]{0}', space=sflag, size = 0x4, scoped, tag = 'scoped memory for tpu_custom_call.1']
    #allocation7 [shape = 'u8[16384]{0}', space=vmem, size = 0x4000, scoped, tag = 'input window, operand 3, single buffered']
    #allocation8 [shape = 'u8[16384]{0}', space=vmem, size = 0x4000, scoped, tag = 'input window, operand 5, single buffered']
    #allocation9 [shape = 's32[1]{0}', space=sflag, size = 0x4, scoped, tag = 'scoped memory for tpu_custom_call.1']
    #allocation10 [shape = 'u8[16384]{0}', space=vmem, size = 0x4000, scoped, tag = 'input window, operand 7, single buffered']
    #allocation11 [shape = 'u8[8192]{0}', space=vmem, size = 0x2000, scoped, tag = 'output window, operand 0, single buffered']
    %14 = vsyncpa [#allocation3], 0
    %15 = vsyncpa [#allocation6], 0
    %16 = vsyncpa [#allocation9], 0
    %17 = vsyncpa [#allocation4], 0
    // Predicated region
    $region2: #{tpu_custom_call.1} parent=1 // pred_check
      _
    $region3: #{tpu_custom_call.1} parent=1 // pred_check_branch
      %19 = sbr.rel (0) target = $region5
    $region4: #{tpu_custom_call.1} parent=1 // pred_region
      %s21 = ssub.s32 256, 256
      %22 = vsyncadd [#allocation3], %s21
      %s23 = sshll.u32 [#allocation2], 4
      %s24 = int_to_ptr.vmem [resolvable:$true] %s23
      %29 = dma.hbm_to_vmem [thread:$0]  %s0, 256, %s24, [#allocation3], 128, 128, 8
    $region5: #{tpu_custom_call.1} parent=1 // pred_fallthru
      _
    // Predicated region
    $region6: #{tpu_custom_call.1} parent=1 // pred_check
      _
    $region7: #{tpu_custom_call.1} parent=1 // pred_check_branch
      %31 = sbr.rel (0) target = $region9
    $region8: #{tpu_custom_call.1} parent=1 // pred_region
      %s33 = ssub.s32 1024, 1024
      %34 = vsyncadd [#allocation6], %s33
      %s35 = sshll.u32 [#allocation5], 4
      %s36 = int_to_ptr.vmem [resolvable:$true] %s35
      %41 = dma.hbm_to_vmem [thread:$0]  %s1, 1024, %s36, [#allocation6], 128, 128, 8
    $region9: #{tpu_custom_call.1} parent=1 // pred_fallthru
      _
    // Predicated region
    $region10: #{tpu_custom_call.1} parent=1 // pred_check
      _
    $region11: #{tpu_custom_call.1} parent=1 // pred_check_branch
      %43 = sbr.rel (0) target = $region13
    $region12: #{tpu_custom_call.1} parent=1 // pred_region
      _
    $region13: #{tpu_custom_call.1} parent=1 // pred_fallthru
      _
    // Predicated region
    $region14: #{tpu_custom_call.1} parent=1 // pred_check
      _
    $region15: #{tpu_custom_call.1} parent=1 // pred_check_branch
      %45 = sbr.rel (0) target = $region17
    $region16: #{tpu_custom_call.1} parent=1 // pred_region
      %s47 = ssub.s32 512, 512
      %48 = vsyncadd [#allocation6], %s47
      %s49 = sshll.u32 [#allocation7], 4
      %s50 = int_to_ptr.vmem [resolvable:$true] %s49
      %55 = dma.hbm_to_vmem [thread:$0]  %s3, 512, %s50, [#allocation6], 64, 64, 4
    $region17: #{tpu_custom_call.1} parent=1 // pred_fallthru
      _
    // Predicated region
    $region18: #{tpu_custom_call.1} parent=1 // pred_check
      _
    $region19: #{tpu_custom_call.1} parent=1 // pred_check_branch
      %57 = sbr.rel (0) target = $region21
    $region20: #{tpu_custom_call.1} parent=1 // pred_region
      _
    $region21: #{tpu_custom_call.1} parent=1 // pred_fallthru
      _
    // Predicated region
    $region22: #{tpu_custom_call.1} parent=1 // pred_check
      _
    $region23: #{tpu_custom_call.1} parent=1 // pred_check_branch
      %59 = sbr.rel (0) target = $region25
    $region24: #{tpu_custom_call.1} parent=1 // pred_region
      %s61 = ssub.s32 512, 512
      %62 = vsyncadd [#allocation9], %s61
      %s63 = sshll.u32 [#allocation8], 4
      %s64 = int_to_ptr.vmem [resolvable:$true] %s63
      %69 = dma.hbm_to_vmem [thread:$0]  %s5, 512, %s64, [#allocation9], 64, 64, 4
    $region25: #{tpu_custom_call.1} parent=1 // pred_fallthru
      _
    // Predicated region
    $region26: #{tpu_custom_call.1} parent=1 // pred_check
      _
    $region27: #{tpu_custom_call.1} parent=1 // pred_check_branch
      %71 = sbr.rel (0) target = $region29
    $region28: #{tpu_custom_call.1} parent=1 // pred_region
      _
    $region29: #{tpu_custom_call.1} parent=1 // pred_fallthru
      _
    // Predicated region
    $region30: #{tpu_custom_call.1} parent=1 // pred_check
      _
    $region31: #{tpu_custom_call.1} parent=1 // pred_check_branch
      %73 = sbr.rel (0) target = $region33
    $region32: #{tpu_custom_call.1} parent=1 // pred_region
      %s75 = ssub.s32 512, 512
      %76 = vsyncadd [#allocation9], %s75
      %s77 = sshll.u32 [#allocation10], 4
      %s78 = int_to_ptr.vmem [resolvable:$true] %s77
      %83 = dma.hbm_to_vmem [thread:$0]  %s7, 512, %s78, [#allocation9], 64, 64, 4
    $region33: #{tpu_custom_call.1} parent=1 // pred_fallthru
      _
    // Predicated region
    $region34: #{tpu_custom_call.1} parent=1 // pred_check
      _
    $region35: #{tpu_custom_call.1} parent=1 // pred_check_branch
      %85 = sbr.rel (0) target = $region37
    $region36: #{tpu_custom_call.1} parent=1 // pred_region
      _
    $region37: #{tpu_custom_call.1} parent=1 // pred_fallthru
      _
    // Predicated region
    $region38: #{tpu_custom_call.1} parent=1 // pred_check
      _
    $region39: #{tpu_custom_call.1} parent=1 // pred_check_branch
      %87 = sbr.rel (0) target = $region41
    $region40: #{tpu_custom_call.1} parent=1 // pred_region
      %88 = dma.done [#allocation3], 256
    $region41: #{tpu_custom_call.1} parent=1 // pred_fallthru
      _
    // Predicated region
    $region42: #{tpu_custom_call.1} parent=1 // pred_check
      _
    $region43: #{tpu_custom_call.1} parent=1 // pred_check_branch
      %90 = sbr.rel (0) target = $region45
    $region44: #{tpu_custom_call.1} parent=1 // pred_region
      %91 = dma.done [#allocation6], 1024
    $region45: #{tpu_custom_call.1} parent=1 // pred_fallthru
      _
    // Predicated region
    $region46: #{tpu_custom_call.1} parent=1 // pred_check
      _
    $region47: #{tpu_custom_call.1} parent=1 // pred_check_branch
      %93 = sbr.rel (0) target = $region49
    $region48: #{tpu_custom_call.1} parent=1 // pred_region
      %94 = dma.done [#allocation6], 512
    $region49: #{tpu_custom_call.1} parent=1 // pred_fallthru
      _
    // Predicated region
    $region50: #{tpu_custom_call.1} parent=1 // pred_check
      _
    $region51: #{tpu_custom_call.1} parent=1 // pred_check_branch
      %96 = sbr.rel (0) target = $region53
    $region52: #{tpu_custom_call.1} parent=1 // pred_region
      %97 = dma.done [#allocation9], 512
    $region53: #{tpu_custom_call.1} parent=1 // pred_fallthru
      _
    // Predicated region
    $region54: #{tpu_custom_call.1} parent=1 // pred_check
      _
    $region55: #{tpu_custom_call.1} parent=1 // pred_check_branch
      %99 = sbr.rel (0) target = $region57
    $region56: #{tpu_custom_call.1} parent=1 // pred_region
      %100 = dma.done [#allocation9], 512
    $region57: #{tpu_custom_call.1} parent=1 // pred_fallthru
      _
    %v102 = vld [vmem:[#allocation2] sm:$0xff]
    %v103 = vld [vmem:[#allocation2 + $0x8] sm:$0xff]
    %vm104 = vcmask 523264
    %v105 = vsel %vm104, %v102, 0.0
    %106 = vadd.xlane.f32.xlu0 %v105
    %v107 = vpop.xlane.xlu0 %106
    %v108 = vsel %vm104, %v103, 0.0
    %109 = vadd.xlane.f32.xlu0 %v108
    %v110 = vpop.xlane.xlu0 %109
    %v111 = vrcp.pop 64.0
    %v112 = vmul.f32 %v107, %v111
    %v113 = vmul.f32 %v110, %v111
    %v114 = vsub.f32 %v102, %v112
    %v115 = vsub.f32 %v103, %v113
    %v116 = vmul.f32 %v114, %v114
    %v117 = vmul.f32 %v115, %v115
    %v118 = vsel %vm104, %v116, 0.0
    %119 = vadd.xlane.f32.xlu0 %v118
    %v120 = vpop.xlane.xlu0 %119
    %v121 = vsel %vm104, %v117, 0.0
    %122 = vadd.xlane.f32.xlu0 %v121
    %v123 = vpop.xlane.xlu0 %122
    %v124 = vmul.f32 %v120, %v111
    %v125 = vmul.f32 %v123, %v111
    %v126 = vadd.f32 %v124, 1e-05
    %v127 = vadd.f32 %v125, 1e-05
    %v128 = vrsqrt.pop %v126
    %v129 = vrsqrt.pop %v127
    %v130 = vmul.f32 %v114, %v128
    %v131 = vmul.f32 %v115, %v129
    %v132 = vpack.c.bf16 %v131, %v130
    %v133 = vld [vmem:[#allocation5] sm:$0xff]
    %v134 = vld [vmem:[#allocation5 + $0x8] sm:$0xff]
    %v135 = vld [vmem:[#allocation5 + $0x10] sm:$0xff]
    %v136 = vld [vmem:[#allocation5 + $0x18] sm:$0xff]
    %v137 = vld [vmem:[#allocation5 + $0x20] sm:$0xff]
    %v138 = vld [vmem:[#allocation5 + $0x28] sm:$0xff]
    %v139 = vld [vmem:[#allocation5 + $0x30] sm:$0xff]
    %v140 = vld [vmem:[#allocation5 + $0x38] sm:$0xff]
    %v141 = vld [vmem:[%s2] sm:$0x3]
    %v143 = vlaneseq
    %v144 = vshrl.u32 %v143, 7
    %v145 = vsub.s32 0, %v144
    %v146 = vrot.slane %v141, %v145
    %v147 = vlaneseq
    %v148 = vshrl.u32 %v147, 7
    %v149 = vsub.s32 1, %v148
    %v150 = vrot.slane %v141, %v149
    %v161 = vunpack.c.l.b16 %v133
    %v162 = vunpack.c.h.b16 %v133
    %v163 = vunpack.c.l.b16 %v134
    %v164 = vunpack.c.h.b16 %v134
    %v165 = vunpack.c.l.b16 %v135
    %v166 = vunpack.c.h.b16 %v135
    %v167 = vunpack.c.l.b16 %v136
    %v168 = vunpack.c.h.b16 %v136
    %v169 = vunpack.c.l.b16 %v137
    %v170 = vunpack.c.h.b16 %v137
    %v171 = vunpack.c.l.b16 %v138
    %v172 = vunpack.c.h.b16 %v138
    %v173 = vunpack.c.l.b16 %v139
    %v174 = vunpack.c.h.b16 %v139
    %v175 = vunpack.c.l.b16 %v140
    %v176 = vunpack.c.h.b16 %v140
    %v177 = vpack.c.b16 %v163, %v161
    %v178 = vpack.c.b16 %v164, %v162
    %v179 = vpack.c.b16 %v167, %v165
    %v180 = vpack.c.b16 %v168, %v166
    %v181 = vpack.c.b16 %v171, %v169
    %v182 = vpack.c.b16 %v172, %v170
    %v183 = vpack.c.b16 %v175, %v173
    %v184 = vpack.c.b16 %v176, %v174
    %v194 = vsel %vm104, %v132, 0
    %196 = vmatprep.subr.bf16.mxu0 %v178
    %197 = vmatpush1.bf16.msra.mxu0 %v177
    %198 = vmatprep.subr.bf16.mxu0 %v180
    %199 = vmatpush1.bf16.msra.mxu0 %v179
    %200 = vmatprep.subr.bf16.mxu0 %v182
    %201 = vmatpush1.bf16.msra.mxu0 %v181
    %202 = vmatprep.subr.bf16.mxu0 %v184
    %203 = vmatpush1.bf16.msra.mxu0 %v183
    %204 = vmatprep.subr.bf16.mxu0 0
    %205 = vmatpush1.bf16.msra.mxu0 0
    %206 = vmatprep.subr.bf16.mxu0 0
    %207 = vmatpush1.bf16.msra.mxu0 0
    %208 = vmatprep.subr.bf16.mxu0 0
    %209 = vmatpush1.bf16.msra.mxu0 0
    %210 = vmatprep.subr.bf16.mxu0 0
    %211 = vmatpush1.bf16.msra.mxu0 0
    %212 = vmatprep.subr.bf16.mxu0 0
    %213 = vmatpush1.bf16.msra.mxu0 0
    %214 = vmatprep.subr.bf16.mxu0 0
    %215 = vmatpush1.bf16.msra.mxu0 0
    %216 = vmatprep.subr.bf16.mxu0 0
    %217 = vmatpush1.bf16.msra.mxu0 0
    %218 = vmatprep.subr.bf16.mxu0 0
    %219 = vmatpush1.bf16.msra.mxu0 0
    %220 = vmatprep.subr.bf16.mxu0 0
    %221 = vmatpush1.bf16.msra.mxu0 0
    %222 = vmatprep.subr.bf16.mxu0 0
    %223 = vmatpush1.bf16.msra.mxu0 0
    %224 = vmatprep.subr.bf16.mxu0 0
    %225 = vmatpush1.bf16.msra.mxu0 0
    %226 = vmatprep.subr.bf16.mxu0 0
    %227 = vmatpush1.bf16.msra.mxu0 0
    %228 = vmatprep.mubr.bf16.mxu0 0
    %229 = vmatmul.mubr.bf16.gmra.mrb[0].mxu0 %v194
    %v230 = vpop.f32.mrb[0].mxu0
    %v231 = vadd.f32 %v146, %v230
    %v232 = vpop.f32.mrb[0].mxu0
    %v233 = vadd.f32 %v150, %v232
    %v234 = vpop.f32.mrb[0].mxu0
    %v235 = vadd.f32 %v146, %v234
    %v236 = vpop.f32.mrb[0].mxu0
    %v237 = vadd.f32 %v150, %v236
    %238 = vdwg.mxu0
    %241 = vrot.lane.b32.xlu0 %v231, 120
    %v242 = vpop.permute.xlu0 %241
    %243 = vrot.lane.b32.xlu0 %v235, 120
    %v244 = vpop.permute.xlu0 %243
    %247 = vrot.lane.b32.xlu0 %v231, 112
    %v248 = vpop.permute.xlu0 %247
    %249 = vrot.lane.b32.xlu0 %v235, 112
    %v250 = vpop.permute.xlu0 %249
    %253 = vrot.lane.b32.xlu0 %v231, 104
    %v254 = vpop.permute.xlu0 %253
    %255 = vrot.lane.b32.xlu0 %v235, 104
    %v256 = vpop.permute.xlu0 %255
    %259 = vrot.lane.b32.xlu0 %v231, 96
    %v260 = vpop.permute.xlu0 %259
    %261 = vrot.lane.b32.xlu0 %v235, 96
    %v262 = vpop.permute.xlu0 %261
    %265 = vrot.lane.b32.xlu0 %v231, 88
    %v266 = vpop.permute.xlu0 %265
    %267 = vrot.lane.b32.xlu0 %v235, 88
    %v268 = vpop.permute.xlu0 %267
    %271 = vrot.lane.b32.xlu0 %v231, 80
    %v272 = vpop.permute.xlu0 %271
    %273 = vrot.lane.b32.xlu0 %v235, 80
    %v274 = vpop.permute.xlu0 %273
    %277 = vrot.lane.b32.xlu0 %v231, 72
    %v278 = vpop.permute.xlu0 %277
    %279 = vrot.lane.b32.xlu0 %v235, 72
    %v280 = vpop.permute.xlu0 %279
    %v283 = vmul.f32 %v231, 0.35355338
    %v284 = vmul.f32 %v235, 0.35355338
    %v285 = vmul.f32 %v242, 0.35355338
    %v286 = vmul.f32 %v244, 0.35355338
    %v287 = vmul.f32 %v248, 0.35355338
    %v288 = vmul.f32 %v250, 0.35355338
    %v289 = vmul.f32 %v254, 0.35355338
    %v290 = vmul.f32 %v256, 0.35355338
    %v291 = vmul.f32 %v260, 0.35355338
    %v292 = vmul.f32 %v262, 0.35355338
    %v293 = vmul.f32 %v266, 0.35355338
    %v294 = vmul.f32 %v268, 0.35355338
    %v295 = vmul.f32 %v272, 0.35355338
    %v296 = vmul.f32 %v274, 0.35355338
    %v297 = vmul.f32 %v278, 0.35355338
    %v298 = vmul.f32 %v280, 0.35355338
    %v299 = vpack.c.bf16 %v283, %v283
    %v300 = vpack.c.bf16 %v284, %v284
    %v301 = vpack.c.bf16 %v285, %v285
    %v302 = vpack.c.bf16 %v286, %v286
    %v303 = vpack.c.bf16 %v287, %v287
    %v304 = vpack.c.bf16 %v288, %v288
    %v305 = vpack.c.bf16 %v289, %v289
    %v306 = vpack.c.bf16 %v290, %v290
    %v307 = vpack.c.bf16 %v291, %v291
    %v308 = vpack.c.bf16 %v292, %v292
    %v309 = vpack.c.bf16 %v293, %v293
    %v310 = vpack.c.bf16 %v294, %v294
    %v311 = vpack.c.bf16 %v295, %v295
    %v312 = vpack.c.bf16 %v296, %v296
    %v313 = vpack.c.bf16 %v297, %v297
    %v314 = vpack.c.bf16 %v298, %v298
    %v315 = vpack.c.bf16 %v231, %v231
    %v316 = vpack.c.bf16 %v235, %v235
    %v317 = vpack.c.bf16 %v242, %v242
    %v318 = vpack.c.bf16 %v244, %v244
    %v319 = vpack.c.bf16 %v248, %v248
    %v320 = vpack.c.bf16 %v250, %v250
    %v321 = vpack.c.bf16 %v254, %v254
    %v322 = vpack.c.bf16 %v256, %v256
    %v323 = vpack.c.bf16 %v260, %v260
    %v324 = vpack.c.bf16 %v262, %v262
    %v325 = vpack.c.bf16 %v266, %v266
    %v326 = vpack.c.bf16 %v268, %v268
    %v327 = vpack.c.bf16 %v272, %v272
    %v328 = vpack.c.bf16 %v274, %v274
    %v329 = vpack.c.bf16 %v278, %v278
    %v330 = vpack.c.bf16 %v280, %v280
    %333 = vrot.lane.b32.xlu0 %v233, 120
    %v334 = vpop.permute.xlu0 %333
    %335 = vrot.lane.b32.xlu0 %v237, 120
    %v336 = vpop.permute.xlu0 %335
    %339 = vrot.lane.b32.xlu0 %v233, 112
    %v340 = vpop.permute.xlu0 %339
    %341 = vrot.lane.b32.xlu0 %v237, 112
    %v342 = vpop.permute.xlu0 %341
    %345 = vrot.lane.b32.xlu0 %v233, 104
    %v346 = vpop.permute.xlu0 %345
    %347 = vrot.lane.b32.xlu0 %v237, 104
    %v348 = vpop.permute.xlu0 %347
    %351 = vrot.lane.b32.xlu0 %v233, 96
    %v352 = vpop.permute.xlu0 %351
    %353 = vrot.lane.b32.xlu0 %v237, 96
    %v354 = vpop.permute.xlu0 %353
    %357 = vrot.lane.b32.xlu0 %v233, 88
    %v358 = vpop.permute.xlu0 %357
    %359 = vrot.lane.b32.xlu0 %v237, 88
    %v360 = vpop.permute.xlu0 %359
    %363 = vrot.lane.b32.xlu0 %v233, 80
    %v364 = vpop.permute.xlu0 %363
    %365 = vrot.lane.b32.xlu0 %v237, 80
    %v366 = vpop.permute.xlu0 %365
    %369 = vrot.lane.b32.xlu0 %v233, 72
    %v370 = vpop.permute.xlu0 %369
    %371 = vrot.lane.b32.xlu0 %v237, 72
    %v372 = vpop.permute.xlu0 %371
    %v375 = vpack.c.bf16 %v233, %v233
    %v376 = vpack.c.bf16 %v237, %v237
    %v377 = vpack.c.bf16 %v334, %v334
    %v378 = vpack.c.bf16 %v336, %v336
    %v379 = vpack.c.bf16 %v340, %v340
    %v380 = vpack.c.bf16 %v342, %v342
    %v381 = vpack.c.bf16 %v346, %v346
    %v382 = vpack.c.bf16 %v348, %v348
    %v383 = vpack.c.bf16 %v352, %v352
    %v384 = vpack.c.bf16 %v354, %v354
    %v385 = vpack.c.bf16 %v358, %v358
    %v386 = vpack.c.bf16 %v360, %v360
    %v387 = vpack.c.bf16 %v364, %v364
    %v388 = vpack.c.bf16 %v366, %v366
    %v389 = vpack.c.bf16 %v370, %v370
    %v390 = vpack.c.bf16 %v372, %v372
    %392 = vrot.lane.b32.xlu0 %v315, 64
    %v393 = vpop.permute.xlu0 %392
    %vm394 = vcmask 64512
    %v396 = vsel %vm394, %v299, 0
    %v399 = vsel %vm394, %v393, 0
    %401 = vmatprep.subr.bf16.mxu0 0
    %402 = vmatpush1.bf16.xpose.msra.mxu0 %v399
    %403 = vmatprep.subr.bf16.mxu0 0
    %404 = vmatpush1.bf16.xpose.msra.mxu0 0
    %405 = vmatprep.subr.bf16.mxu0 0
    %406 = vmatpush1.bf16.xpose.msra.mxu0 0
    %407 = vmatprep.subr.bf16.mxu0 0
    %408 = vmatpush1.bf16.xpose.msra.mxu0 0
    %409 = vmatprep.subr.bf16.mxu0 0
    %410 = vmatpush1.bf16.xpose.msra.mxu0 0
    %411 = vmatprep.subr.bf16.mxu0 0
    %412 = vmatpush1.bf16.xpose.msra.mxu0 0
    %413 = vmatprep.subr.bf16.mxu0 0
    %414 = vmatpush1.bf16.xpose.msra.mxu0 0
    %415 = vmatprep.subr.bf16.mxu0 0
    %416 = vmatpush1.bf16.xpose.msra.mxu0 0
    %417 = vmatprep.subr.bf16.mxu0 0
    %418 = vmatpush1.bf16.xpose.msra.mxu0 0
    %419 = vmatprep.subr.bf16.mxu0 0
    %420 = vmatpush1.bf16.xpose.msra.mxu0 0
    %421 = vmatprep.subr.bf16.mxu0 0
    %422 = vmatpush1.bf16.xpose.msra.mxu0 0
    %423 = vmatprep.subr.bf16.mxu0 0
    %424 = vmatpush1.bf16.xpose.msra.mxu0 0
    %425 = vmatprep.subr.bf16.mxu0 0
    %426 = vmatpush1.bf16.xpose.msra.mxu0 0
    %427 = vmatprep.subr.bf16.mxu0 0
    %428 = vmatpush1.bf16.xpose.msra.mxu0 0
    %429 = vmatprep.subr.bf16.mxu0 0
    %430 = vmatpush1.bf16.xpose.msra.mxu0 0
    %431 = vmatprep.subr.bf16.mxu0 0
    %432 = vmatpush1.bf16.xpose.msra.mxu0 0
    %433 = vmatprep.mubr.bf16.mxu0 0
    %434 = vmatmul.mubr.bf16.gmra.mrb[0].mxu0 %v396
    %v435 = vpop.f32.mrb[0].mxu0
    %v436 = vadd.f32 0.0, %v435
    %v437 = vpop.f32.mrb[0].mxu0
    %v438 = vpop.f32.mrb[0].mxu0
    %v439 = vpop.f32.mrb[0].mxu0
    %440 = vdwg.mxu0
    %442 = vrot.lane.b32.xlu0 %v316, 64
    %v443 = vpop.permute.xlu0 %442
    %v445 = vsel %vm394, %v300, 0
    %v448 = vsel %vm394, %v443, 0
    %450 = vmatprep.subr.bf16.mxu0 0
    %451 = vmatpush1.bf16.xpose.msra.mxu0 %v448
    %452 = vmatprep.subr.bf16.mxu0 0
    %453 = vmatpush1.bf16.xpose.msra.mxu0 0
    %454 = vmatprep.subr.bf16.mxu0 0
    %455 = vmatpush1.bf16.xpose.msra.mxu0 0
    %456 = vmatprep.subr.bf16.mxu0 0
    %457 = vmatpush1.bf16.xpose.msra.mxu0 0
    %458 = vmatprep.subr.bf16.mxu0 0
    %459 = vmatpush1.bf16.xpose.msra.mxu0 0
    %460 = vmatprep.subr.bf16.mxu0 0
    %461 = vmatpush1.bf16.xpose.msra.mxu0 0
    %462 = vmatprep.subr.bf16.mxu0 0
    %463 = vmatpush1.bf16.xpose.msra.mxu0 0
    %464 = vmatprep.subr.bf16.mxu0 0
    %465 = vmatpush1.bf16.xpose.msra.mxu0 0
    %466 = vmatprep.subr.bf16.mxu0 0
    %467 = vmatpush1.bf16.xpose.msra.mxu0 0
    %468 = vmatprep.subr.bf16.mxu0 0
    %469 = vmatpush1.bf16.xpose.msra.mxu0 0
    %470 = vmatprep.subr.bf16.mxu0 0
    %471 = vmatpush1.bf16.xpose.msra.mxu0 0
    %472 = vmatprep.subr.bf16.mxu0 0
    %473 = vmatpush1.bf16.xpose.msra.mxu0 0
    %474 = vmatprep.subr.bf16.mxu0 0
    %475 = vmatpush1.bf16.xpose.msra.mxu0 0
    %476 = vmatprep.subr.bf16.mxu0 0
    %477 = vmatpush1.bf16.xpose.msra.mxu0 0
    %478 = vmatprep.subr.bf16.mxu0 0
    %479 = vmatpush1.bf16.xpose.msra.mxu0 0
    %480 = vmatprep.subr.bf16.mxu0 0
    %481 = vmatpush1.bf16.xpose.msra.mxu0 0
    %482 = vmatprep.mubr.bf16.mxu0 0
    %483 = vmatmul.mubr.bf16.gmra.mrb[0].mxu0 %v445
    %v484 = vpop.f32.mrb[0].mxu0
    %v485 = vadd.f32 0.0, %v484
    %v486 = vpop.f32.mrb[0].mxu0
    %v487 = vpop.f32.mrb[0].mxu0
    %v488 = vpop.f32.mrb[0].mxu0
    %489 = vdwg.mxu0
    %491 = vrot.lane.b32.xlu0 %v317, 64
    %v492 = vpop.permute.xlu0 %491
    %v494 = vsel %vm394, %v301, 0
    %v497 = vsel %vm394, %v492, 0
    %499 = vmatprep.subr.bf16.mxu0 0
    %500 = vmatpush1.bf16.xpose.msra.mxu0 %v497
    %501 = vmatprep.subr.bf16.mxu0 0
    %502 = vmatpush1.bf16.xpose.msra.mxu0 0
    %503 = vmatprep.subr.bf16.mxu0 0
    %504 = vmatpush1.bf16.xpose.msra.mxu0 0
    %505 = vmatprep.subr.bf16.mxu0 0
    %506 = vmatpush1.bf16.xpose.msra.mxu0 0
    %507 = vmatprep.subr.bf16.mxu0 0
    %508 = vmatpush1.bf16.xpose.msra.mxu0 0
    %509 = vmatprep.subr.bf16.mxu0 0
    %510 = vmatpush1.bf16.xpose.msra.mxu0 0
    %511 = vmatprep.subr.bf16.mxu0 0
    %512 = vmatpush1.bf16.xpose.msra.mxu0 0
    %513 = vmatprep.subr.bf16.mxu0 0
    %514 = vmatpush1.bf16.xpose.msra.mxu0 0
    %515 = vmatprep.subr.bf16.mxu0 0
    %516 = vmatpush1.bf16.xpose.msra.mxu0 0
    %517 = vmatprep.subr.bf16.mxu0 0
    %518 = vmatpush1.bf16.xpose.msra.mxu0 0
    %519 = vmatprep.subr.bf16.mxu0 0
    %520 = vmatpush1.bf16.xpose.msra.mxu0 0
    %521 = vmatprep.subr.bf16.mxu0 0
    %522 = vmatpush1.bf16.xpose.msra.mxu0 0
    %523 = vmatprep.subr.bf16.mxu0 0
    %524 = vmatpush1.bf16.xpose.msra.mxu0 0
    %525 = vmatprep.subr.bf16.mxu0 0
    %526 = vmatpush1.bf16.xpose.msra.mxu0 0
    %527 = vmatprep.subr.bf16.mxu0 0
    %528 = vmatpush1.bf16.xpose.msra.mxu0 0
    %529 = vmatprep.subr.bf16.mxu0 0
    %530 = vmatpush1.bf16.xpose.msra.mxu0 0
    %531 = vmatprep.mubr.bf16.mxu0 0
    %532 = vmatmul.mubr.bf16.gmra.mrb[0].mxu0 %v494
    %v533 = vpop.f32.mrb[0].mxu0
    %v534 = vadd.f32 0.0, %v533
    %v535 = vpop.f32.mrb[0].mxu0
    %v536 = vpop.f32.mrb[0].mxu0
    %v537 = vpop.f32.mrb[0].mxu0
    %538 = vdwg.mxu0
    %540 = vrot.lane.b32.xlu0 %v318, 64
    %v541 = vpop.permute.xlu0 %540
    %v543 = vsel %vm394, %v302, 0
    %v546 = vsel %vm394, %v541, 0
    %548 = vmatprep.subr.bf16.mxu0 0
    %549 = vmatpush1.bf16.xpose.msra.mxu0 %v546
    %550 = vmatprep.subr.bf16.mxu0 0
    %551 = vmatpush1.bf16.xpose.msra.mxu0 0
    %552 = vmatprep.subr.bf16.mxu0 0
    %553 = vmatpush1.bf16.xpose.msra.mxu0 0
    %554 = vmatprep.subr.bf16.mxu0 0
    %555 = vmatpush1.bf16.xpose.msra.mxu0 0
    %556 = vmatprep.subr.bf16.mxu0 0
    %557 = vmatpush1.bf16.xpose.msra.mxu0 0
    %558 = vmatprep.subr.bf16.mxu0 0
    %559 = vmatpush1.bf16.xpose.msra.mxu0 0
    %560 = vmatprep.subr.bf16.mxu0 0
    %561 = vmatpush1.bf16.xpose.msra.mxu0 0
    %562 = vmatprep.subr.bf16.mxu0 0
    %563 = vmatpush1.bf16.xpose.msra.mxu0 0
    %564 = vmatprep.subr.bf16.mxu0 0
    %565 = vmatpush1.bf16.xpose.msra.mxu0 0
    %566 = vmatprep.subr.bf16.mxu0 0
    %567 = vmatpush1.bf16.xpose.msra.mxu0 0
    %568 = vmatprep.subr.bf16.mxu0 0
    %569 = vmatpush1.bf16.xpose.msra.mxu0 0
    %570 = vmatprep.subr.bf16.mxu0 0
    %571 = vmatpush1.bf16.xpose.msra.mxu0 0
    %572 = vmatprep.subr.bf16.mxu0 0
    %573 = vmatpush1.bf16.xpose.msra.mxu0 0
    %574 = vmatprep.subr.bf16.mxu0 0
    %575 = vmatpush1.bf16.xpose.msra.mxu0 0
    %576 = vmatprep.subr.bf16.mxu0 0
    %577 = vmatpush1.bf16.xpose.msra.mxu0 0
    %578 = vmatprep.subr.bf16.mxu0 0
    %579 = vmatpush1.bf16.xpose.msra.mxu0 0
    %580 = vmatprep.mubr.bf16.mxu0 0
    %581 = vmatmul.mubr.bf16.gmra.mrb[0].mxu0 %v543
    %v582 = vpop.f32.mrb[0].mxu0
    %v583 = vadd.f32 0.0, %v582
    %v584 = vpop.f32.mrb[0].mxu0
    %v585 = vpop.f32.mrb[0].mxu0
    %v586 = vpop.f32.mrb[0].mxu0
    %587 = vdwg.mxu0
    %589 = vrot.lane.b32.xlu0 %v319, 64
    %v590 = vpop.permute.xlu0 %589
    %v592 = vsel %vm394, %v303, 0
    %v595 = vsel %vm394, %v590, 0
    %597 = vmatprep.subr.bf16.mxu0 0
    %598 = vmatpush1.bf16.xpose.msra.mxu0 %v595
    %599 = vmatprep.subr.bf16.mxu0 0
    %600 = vmatpush1.bf16.xpose.msra.mxu0 0
    %601 = vmatprep.subr.bf16.mxu0 0
    %602 = vmatpush1.bf16.xpose.msra.mxu0 0
    %603 = vmatprep.subr.bf16.mxu0 0
    %604 = vmatpush1.bf16.xpose.msra.mxu0 0
    %605 = vmatprep.subr.bf16.mxu0 0
    %606 = vmatpush1.bf16.xpose.msra.mxu0 0
    %607 = vmatprep.subr.bf16.mxu0 0
    %608 = vmatpush1.bf16.xpose.msra.mxu0 0
    %609 = vmatprep.subr.bf16.mxu0 0
    %610 = vmatpush1.bf16.xpose.msra.mxu0 0
    %611 = vmatprep.subr.bf16.mxu0 0
    %612 = vmatpush1.bf16.xpose.msra.mxu0 0
    %613 = vmatprep.subr.bf16.mxu0 0
    %614 = vmatpush1.bf16.xpose.msra.mxu0 0
    %615 = vmatprep.subr.bf16.mxu0 0
    %616 = vmatpush1.bf16.xpose.msra.mxu0 0
    %617 = vmatprep.subr.bf16.mxu0 0
    %618 = vmatpush1.bf16.xpose.msra.mxu0 0
    %619 = vmatprep.subr.bf16.mxu0 0
    %620 = vmatpush1.bf16.xpose.msra.mxu0 0
    %621 = vmatprep.subr.bf16.mxu0 0
    %622 = vmatpush1.bf16.xpose.msra.mxu0 0
    %623 = vmatprep.subr.bf16.mxu0 0
    %624 = vmatpush1.bf16.xpose.msra.mxu0 0
    %625 = vmatprep.subr.bf16.mxu0 0
    %626 = vmatpush1.bf16.xpose.msra.mxu0 0
    %627 = vmatprep.subr.bf16.mxu0 0
    %628 = vmatpush1.bf16.xpose.msra.mxu0 0
    %629 = vmatprep.mubr.bf16.mxu0 0
    %630 = vmatmul.mubr.bf16.gmra.mrb[0].mxu0 %v592
    %v631 = vpop.f32.mrb[0].mxu0
    %v632 = vadd.f32 0.0, %v631
    %v633 = vpop.f32.mrb[0].mxu0
    %v634 = vpop.f32.mrb[0].mxu0
    %v635 = vpop.f32.mrb[0].mxu0
    %636 = vdwg.mxu0
    %638 = vrot.lane.b32.xlu0 %v320, 64
    %v639 = vpop.permute.xlu0 %638
    %v641 = vsel %vm394, %v304, 0
    %v644 = vsel %vm394, %v639, 0
    %646 = vmatprep.subr.bf16.mxu0 0
    %647 = vmatpush1.bf16.xpose.msra.mxu0 %v644
    %648 = vmatprep.subr.bf16.mxu0 0
    %649 = vmatpush1.bf16.xpose.msra.mxu0 0
    %650 = vmatprep.subr.bf16.mxu0 0
    %651 = vmatpush1.bf16.xpose.msra.mxu0 0
    %652 = vmatprep.subr.bf16.mxu0 0
    %653 = vmatpush1.bf16.xpose.msra.mxu0 0
    %654 = vmatprep.subr.bf16.mxu0 0
    %655 = vmatpush1.bf16.xpose.msra.mxu0 0
    %656 = vmatprep.subr.bf16.mxu0 0
    %657 = vmatpush1.bf16.xpose.msra.mxu0 0
    %658 = vmatprep.subr.bf16.mxu0 0
    %659 = vmatpush1.bf16.xpose.msra.mxu0 0
    %660 = vmatprep.subr.bf16.mxu0 0
    %661 = vmatpush1.bf16.xpose.msra.mxu0 0
    %662 = vmatprep.subr.bf16.mxu0 0
    %663 = vmatpush1.bf16.xpose.msra.mxu0 0
    %664 = vmatprep.subr.bf16.mxu0 0
    %665 = vmatpush1.bf16.xpose.msra.mxu0 0
    %666 = vmatprep.subr.bf16.mxu0 0
    %667 = vmatpush1.bf16.xpose.msra.mxu0 0
    %668 = vmatprep.subr.bf16.mxu0 0
    %669 = vmatpush1.bf16.xpose.msra.mxu0 0
    %670 = vmatprep.subr.bf16.mxu0 0
    %671 = vmatpush1.bf16.xpose.msra.mxu0 0
    %672 = vmatprep.subr.bf16.mxu0 0
    %673 = vmatpush1.bf16.xpose.msra.mxu0 0
    %674 = vmatprep.subr.bf16.mxu0 0
    %675 = vmatpush1.bf16.xpose.msra.mxu0 0
    %676 = vmatprep.subr.bf16.mxu0 0
    %677 = vmatpush1.bf16.xpose.msra.mxu0 0
    %678 = vmatprep.mubr.bf16.mxu0 0
    %679 = vmatmul.mubr.bf16.gmra.mrb[0].mxu0 %v641
    %v680 = vpop.f32.mrb[0].mxu0
    %v681 = vadd.f32 0.0, %v680
    %v682 = vpop.f32.mrb[0].mxu0
    %v683 = vpop.f32.mrb[0].mxu0
    %v684 = vpop.f32.mrb[0].mxu0
    %685 = vdwg.mxu0
    %687 = vrot.lane.b32.xlu0 %v321, 64
    %v688 = vpop.permute.xlu0 %687
    %v690 = vsel %vm394, %v305, 0
    %v693 = vsel %vm394, %v688, 0
    %695 = vmatprep.subr.bf16.mxu0 0
    %696 = vmatpush1.bf16.xpose.msra.mxu0 %v693
    %697 = vmatprep.subr.bf16.mxu0 0
    %698 = vmatpush1.bf16.xpose.msra.mxu0 0
    %699 = vmatprep.subr.bf16.mxu0 0
    %700 = vmatpush1.bf16.xpose.msra.mxu0 0
    %701 = vmatprep.subr.bf16.mxu0 0
    %702 = vmatpush1.bf16.xpose.msra.mxu0 0
    %703 = vmatprep.subr.bf16.mxu0 0
    %704 = vmatpush1.bf16.xpose.msra.mxu0 0
    %705 = vmatprep.subr.bf16.mxu0 0
    %706 = vmatpush1.bf16.xpose.msra.mxu0 0
    %707 = vmatprep.subr.bf16.mxu0 0
    %708 = vmatpush1.bf16.xpose.msra.mxu0 0
    %709 = vmatprep.subr.bf16.mxu0 0
    %710 = vmatpush1.bf16.xpose.msra.mxu0 0
    %711 = vmatprep.subr.bf16.mxu0 0
    %712 = vmatpush1.bf16.xpose.msra.mxu0 0
    %713 = vmatprep.subr.bf16.mxu0 0
    %714 = vmatpush1.bf16.xpose.msra.mxu0 0
    %715 = vmatprep.subr.bf16.mxu0 0
    %716 = vmatpush1.bf16.xpose.msra.mxu0 0
    %717 = vmatprep.subr.bf16.mxu0 0
    %718 = vmatpush1.bf16.xpose.msra.mxu0 0
    %719 = vmatprep.subr.bf16.mxu0 0
    %720 = vmatpush1.bf16.xpose.msra.mxu0 0
    %721 = vmatprep.subr.bf16.mxu0 0
    %722 = vmatpush1.bf16.xpose.msra.mxu0 0
    %723 = vmatprep.subr.bf16.mxu0 0
    %724 = vmatpush1.bf16.xpose.msra.mxu0 0
    %725 = vmatprep.subr.bf16.mxu0 0
    %726 = vmatpush1.bf16.xpose.msra.mxu0 0
    %727 = vmatprep.mubr.bf16.mxu0 0
    %728 = vmatmul.mubr.bf16.gmra.mrb[0].mxu0 %v690
    %v729 = vpop.f32.mrb[0].mxu0
    %v730 = vadd.f32 0.0, %v729
    %v731 = vpop.f32.mrb[0].mxu0
    %v732 = vpop.f32.mrb[0].mxu0
    %v733 = vpop.f32.mrb[0].mxu0
    %734 = vdwg.mxu0
    %736 = vrot.lane.b32.xlu0 %v322, 64
    %v737 = vpop.permute.xlu0 %736
    %v739 = vsel %vm394, %v306, 0
    %v742 = vsel %vm394, %v737, 0
    %744 = vmatprep.subr.bf16.mxu0 0
    %745 = vmatpush1.bf16.xpose.msra.mxu0 %v742
    %746 = vmatprep.subr.bf16.mxu0 0
    %747 = vmatpush1.bf16.xpose.msra.mxu0 0
    %748 = vmatprep.subr.bf16.mxu0 0
    %749 = vmatpush1.bf16.xpose.msra.mxu0 0
    %750 = vmatprep.subr.bf16.mxu0 0
    %751 = vmatpush1.bf16.xpose.msra.mxu0 0
    %752 = vmatprep.subr.bf16.mxu0 0
    %753 = vmatpush1.bf16.xpose.msra.mxu0 0
    %754 = vmatprep.subr.bf16.mxu0 0
    %755 = vmatpush1.bf16.xpose.msra.mxu0 0
    %756 = vmatprep.subr.bf16.mxu0 0
    %757 = vmatpush1.bf16.xpose.msra.mxu0 0
    %758 = vmatprep.subr.bf16.mxu0 0
    %759 = vmatpush1.bf16.xpose.msra.mxu0 0
    %760 = vmatprep.subr.bf16.mxu0 0
    %761 = vmatpush1.bf16.xpose.msra.mxu0 0
    %762 = vmatprep.subr.bf16.mxu0 0
    %763 = vmatpush1.bf16.xpose.msra.mxu0 0
    %764 = vmatprep.subr.bf16.mxu0 0
    %765 = vmatpush1.bf16.xpose.msra.mxu0 0
    %766 = vmatprep.subr.bf16.mxu0 0
    %767 = vmatpush1.bf16.xpose.msra.mxu0 0
    %768 = vmatprep.subr.bf16.mxu0 0
    %769 = vmatpush1.bf16.xpose.msra.mxu0 0
    %770 = vmatprep.subr.bf16.mxu0 0
    %771 = vmatpush1.bf16.xpose.msra.mxu0 0
    %772 = vmatprep.subr.bf16.mxu0 0
    %773 = vmatpush1.bf16.xpose.msra.mxu0 0
    %774 = vmatprep.subr.bf16.mxu0 0
    %775 = vmatpush1.bf16.xpose.msra.mxu0 0
    %776 = vmatprep.mubr.bf16.mxu0 0
    %777 = vmatmul.mubr.bf16.gmra.mrb[0].mxu0 %v739
    %v778 = vpop.f32.mrb[0].mxu0
    %v779 = vadd.f32 0.0, %v778
    %v780 = vpop.f32.mrb[0].mxu0
    %v781 = vpop.f32.mrb[0].mxu0
    %v782 = vpop.f32.mrb[0].mxu0
    %783 = vdwg.mxu0
    %785 = vrot.lane.b32.xlu0 %v323, 64
    %v786 = vpop.permute.xlu0 %785
    %v788 = vsel %vm394, %v307, 0
    %v791 = vsel %vm394, %v786, 0
    %793 = vmatprep.subr.bf16.mxu0 0
    %794 = vmatpush1.bf16.xpose.msra.mxu0 %v791
    %795 = vmatprep.subr.bf16.mxu0 0
    %796 = vmatpush1.bf16.xpose.msra.mxu0 0
    %797 = vmatprep.subr.bf16.mxu0 0
    %798 = vmatpush1.bf16.xpose.msra.mxu0 0
    %799 = vmatprep.subr.bf16.mxu0 0
    %800 = vmatpush1.bf16.xpose.msra.mxu0 0
    %801 = vmatprep.subr.bf16.mxu0 0
    %802 = vmatpush1.bf16.xpose.msra.mxu0 0
    %803 = vmatprep.subr.bf16.mxu0 0
    %804 = vmatpush1.bf16.xpose.msra.mxu0 0
    %805 = vmatprep.subr.bf16.mxu0 0
    %806 = vmatpush1.bf16.xpose.msra.mxu0 0
    %807 = vmatprep.subr.bf16.mxu0 0
    %808 = vmatpush1.bf16.xpose.msra.mxu0 0
    %809 = vmatprep.subr.bf16.mxu0 0
    %810 = vmatpush1.bf16.xpose.msra.mxu0 0
    %811 = vmatprep.subr.bf16.mxu0 0
    %812 = vmatpush1.bf16.xpose.msra.mxu0 0
    %813 = vmatprep.subr.bf16.mxu0 0
    %814 = vmatpush1.bf16.xpose.msra.mxu0 0
    %815 = vmatprep.subr.bf16.mxu0 0
    %816 = vmatpush1.bf16.xpose.msra.mxu0 0
    %817 = vmatprep.subr.bf16.mxu0 0
    %818 = vmatpush1.bf16.xpose.msra.mxu0 0
    %819 = vmatprep.subr.bf16.mxu0 0
    %820 = vmatpush1.bf16.xpose.msra.mxu0 0
    %821 = vmatprep.subr.bf16.mxu0 0
    %822 = vmatpush1.bf16.xpose.msra.mxu0 0
    %823 = vmatprep.subr.bf16.mxu0 0
    %824 = vmatpush1.bf16.xpose.msra.mxu0 0
    %825 = vmatprep.mubr.bf16.mxu0 0
    %826 = vmatmul.mubr.bf16.gmra.mrb[0].mxu0 %v788
    %v827 = vpop.f32.mrb[0].mxu0
    %v828 = vadd.f32 0.0, %v827
    %v829 = vpop.f32.mrb[0].mxu0
    %v830 = vpop.f32.mrb[0].mxu0
    %v831 = vpop.f32.mrb[0].mxu0
    %832 = vdwg.mxu0
    %834 = vrot.lane.b32.xlu0 %v324, 64
    %v835 = vpop.permute.xlu0 %834
    %v837 = vsel %vm394, %v308, 0
    %v840 = vsel %vm394, %v835, 0
    %842 = vmatprep.subr.bf16.mxu0 0
    %843 = vmatpush1.bf16.xpose.msra.mxu0 %v840
    %844 = vmatprep.subr.bf16.mxu0 0
    %845 = vmatpush1.bf16.xpose.msra.mxu0 0
    %846 = vmatprep.subr.bf16.mxu0 0
    %847 = vmatpush1.bf16.xpose.msra.mxu0 0
    %848 = vmatprep.subr.bf16.mxu0 0
    %849 = vmatpush1.bf16.xpose.msra.mxu0 0
    %850 = vmatprep.subr.bf16.mxu0 0
    %851 = vmatpush1.bf16.xpose.msra.mxu0 0
    %852 = vmatprep.subr.bf16.mxu0 0
    %853 = vmatpush1.bf16.xpose.msra.mxu0 0
    %854 = vmatprep.subr.bf16.mxu0 0
    %855 = vmatpush1.bf16.xpose.msra.mxu0 0
    %856 = vmatprep.subr.bf16.mxu0 0
    %857 = vmatpush1.bf16.xpose.msra.mxu0 0
    %858 = vmatprep.subr.bf16.mxu0 0
    %859 = vmatpush1.bf16.xpose.msra.mxu0 0
    %860 = vmatprep.subr.bf16.mxu0 0
    %861 = vmatpush1.bf16.xpose.msra.mxu0 0
    %862 = vmatprep.subr.bf16.mxu0 0
    %863 = vmatpush1.bf16.xpose.msra.mxu0 0
    %864 = vmatprep.subr.bf16.mxu0 0
    %865 = vmatpush1.bf16.xpose.msra.mxu0 0
    %866 = vmatprep.subr.bf16.mxu0 0
    %867 = vmatpush1.bf16.xpose.msra.mxu0 0
    %868 = vmatprep.subr.bf16.mxu0 0
    %869 = vmatpush1.bf16.xpose.msra.mxu0 0
    %870 = vmatprep.subr.bf16.mxu0 0
    %871 = vmatpush1.bf16.xpose.msra.mxu0 0
    %872 = vmatprep.subr.bf16.mxu0 0
    %873 = vmatpush1.bf16.xpose.msra.mxu0 0
    %874 = vmatprep.mubr.bf16.mxu0 0
    %875 = vmatmul.mubr.bf16.gmra.mrb[0].mxu0 %v837
    %v876 = vpop.f32.mrb[0].mxu0
    %v877 = vadd.f32 0.0, %v876
    %v878 = vpop.f32.mrb[0].mxu0
    %v879 = vpop.f32.mrb[0].mxu0
    %v880 = vpop.f32.mrb[0].mxu0
    %881 = vdwg.mxu0
    %883 = vrot.lane.b32.xlu0 %v325, 64
    %v884 = vpop.permute.xlu0 %883
    %v886 = vsel %vm394, %v309, 0
    %v889 = vsel %vm394, %v884, 0
    %891 = vmatprep.subr.bf16.mxu0 0
    %892 = vmatpush1.bf16.xpose.msra.mxu0 %v889
    %893 = vmatprep.subr.bf16.mxu0 0
    %894 = vmatpush1.bf16.xpose.msra.mxu0 0
    %895 = vmatprep.subr.bf16.mxu0 0
    %896 = vmatpush1.bf16.xpose.msra.mxu0 0
    %897 = vmatprep.subr.bf16.mxu0 0
    %898 = vmatpush1.bf16.xpose.msra.mxu0 0
    %899 = vmatprep.subr.bf16.mxu0 0
    %900 = vmatpush1.bf16.xpose.msra.mxu0 0
    %901 = vmatprep.subr.bf16.mxu0 0
    %902 = vmatpush1.bf16.xpose.msra.mxu0 0
    %903 = vmatprep.subr.bf16.mxu0 0
    %904 = vmatpush1.bf16.xpose.msra.mxu0 0
    %905 = vmatprep.subr.bf16.mxu0 0
    %906 = vmatpush1.bf16.xpose.msra.mxu0 0
    %907 = vmatprep.subr.bf16.mxu0 0
    %908 = vmatpush1.bf16.xpose.msra.mxu0 0
    %909 = vmatprep.subr.bf16.mxu0 0
    %910 = vmatpush1.bf16.xpose.msra.mxu0 0
    %911 = vmatprep.subr.bf16.mxu0 0
    %912 = vmatpush1.bf16.xpose.msra.mxu0 0
    %913 = vmatprep.subr.bf16.mxu0 0
    %914 = vmatpush1.bf16.xpose.msra.mxu0 0
    %915 = vmatprep.subr.bf16.mxu0 0
    %916 = vmatpush1.bf16.xpose.msra.mxu0 0
    %917 = vmatprep.subr.bf16.mxu0 0
    %918 = vmatpush1.bf16.xpose.msra.mxu0 0
    %919 = vmatprep.subr.bf16.mxu0 0
    %920 = vmatpush1.bf16.xpose.msra.mxu0 0
    %921 = vmatprep.subr.bf16.mxu0 0
    %922 = vmatpush1.bf16.xpose.msra.mxu0 0
    %923 = vmatprep.mubr.bf16.mxu0 0
    %924 = vmatmul.mubr.bf16.gmra.mrb[0].mxu0 %v886
    %v925 = vpop.f32.mrb[0].mxu0
    %v926 = vadd.f32 0.0, %v925
    %v927 = vpop.f32.mrb[0].mxu0
    %v928 = vpop.f32.mrb[0].mxu0
    %v929 = vpop.f32.mrb[0].mxu0
    %930 = vdwg.mxu0
    %932 = vrot.lane.b32.xlu0 %v326, 64
    %v933 = vpop.permute.xlu0 %932
    %v935 = vsel %vm394, %v310, 0
    %v938 = vsel %vm394, %v933, 0
    %940 = vmatprep.subr.bf16.mxu0 0
    %941 = vmatpush1.bf16.xpose.msra.mxu0 %v938
    %942 = vmatprep.subr.bf16.mxu0 0
    %943 = vmatpush1.bf16.xpose.msra.mxu0 0
    %944 = vmatprep.subr.bf16.mxu0 0
    %945 = vmatpush1.bf16.xpose.msra.mxu0 0
    %946 = vmatprep.subr.bf16.mxu0 0
    %947 = vmatpush1.bf16.xpose.msra.mxu0 0
    %948 = vmatprep.subr.bf16.mxu0 0
    %949 = vmatpush1.bf16.xpose.msra.mxu0 0
    %950 = vmatprep.subr.bf16.mxu0 0
    %951 = vmatpush1.bf16.xpose.msra.mxu0 0
    %952 = vmatprep.subr.bf16.mxu0 0
    %953 = vmatpush1.bf16.xpose.msra.mxu0 0
    %954 = vmatprep.subr.bf16.mxu0 0
    %955 = vmatpush1.bf16.xpose.msra.mxu0 0
    %956 = vmatprep.subr.bf16.mxu0 0
    %957 = vmatpush1.bf16.xpose.msra.mxu0 0
    %958 = vmatprep.subr.bf16.mxu0 0
    %959 = vmatpush1.bf16.xpose.msra.mxu0 0
    %960 = vmatprep.subr.bf16.mxu0 0
    %961 = vmatpush1.bf16.xpose.msra.mxu0 0
    %962 = vmatprep.subr.bf16.mxu0 0
    %963 = vmatpush1.bf16.xpose.msra.mxu0 0
    %964 = vmatprep.subr.bf16.mxu0 0
    %965 = vmatpush1.bf16.xpose.msra.mxu0 0
    %966 = vmatprep.subr.bf16.mxu0 0
    %967 = vmatpush1.bf16.xpose.msra.mxu0 0
    %968 = vmatprep.subr.bf16.mxu0 0
    %969 = vmatpush1.bf16.xpose.msra.mxu0 0
    %970 = vmatprep.subr.bf16.mxu0 0
    %971 = vmatpush1.bf16.xpose.msra.mxu0 0
    %972 = vmatprep.mubr.bf16.mxu0 0
    %973 = vmatmul.mubr.bf16.gmra.mrb[0].mxu0 %v935
    %v974 = vpop.f32.mrb[0].mxu0
    %v975 = vadd.f32 0.0, %v974
    %v976 = vpop.f32.mrb[0].mxu0
    %v977 = vpop.f32.mrb[0].mxu0
    %v978 = vpop.f32.mrb[0].mxu0
    %979 = vdwg.mxu0
    %981 = vrot.lane.b32.xlu0 %v327, 64
    %v982 = vpop.permute.xlu0 %981
    %v984 = vsel %vm394, %v311, 0
    %v987 = vsel %vm394, %v982, 0
    %989 = vmatprep.subr.bf16.mxu0 0
    %990 = vmatpush1.bf16.xpose.msra.mxu0 %v987
    %991 = vmatprep.subr.bf16.mxu0 0
    %992 = vmatpush1.bf16.xpose.msra.mxu0 0
    %993 = vmatprep.subr.bf16.mxu0 0
    %994 = vmatpush1.bf16.xpose.msra.mxu0 0
    %995 = vmatprep.subr.bf16.mxu0 0
    %996 = vmatpush1.bf16.xpose.msra.mxu0 0
    %997 = vmatprep.subr.bf16.mxu0 0
    %998 = vmatpush1.bf16.xpose.msra.mxu0 0
    %999 = vmatprep.subr.bf16.mxu0 0
    %1000 = vmatpush1.bf16.xpose.msra.mxu0 0
    %1001 = vmatprep.subr.bf16.mxu0 0
    %1002 = vmatpush1.bf16.xpose.msra.mxu0 0
    %1003 = vmatprep.subr.bf16.mxu0 0
    %1004 = vmatpush1.bf16.xpose.msra.mxu0 0
    %1005 = vmatprep.subr.bf16.mxu0 0
    %1006 = vmatpush1.bf16.xpose.msra.mxu0 0
    %1007 = vmatprep.subr.bf16.mxu0 0
    %1008 = vmatpush1.bf16.xpose.msra.mxu0 0
    %1009 = vmatprep.subr.bf16.mxu0 0
    %1010 = vmatpush1.bf16.xpose.msra.mxu0 0
    %1011 = vmatprep.subr.bf16.mxu0 0
    %1012 = vmatpush1.bf16.xpose.msra.mxu0 0
    %1013 = vmatprep.subr.bf16.mxu0 0
    %1014 = vmatpush1.bf16.xpose.msra.mxu0 0
    %1015 = vmatprep.subr.bf16.mxu0 0
    %1016 = vmatpush1.bf16.xpose.msra.mxu0 0
    %1017 = vmatprep.subr.bf16.mxu0 0
    %1018 = vmatpush1.bf16.xpose.msra.mxu0 0
    %1019 = vmatprep.subr.bf16.mxu0 0
    %1020 = vmatpush1.bf16.xpose.msra.mxu0 0
    %1021 = vmatprep.mubr.bf16.mxu0 0
    %1022 = vmatmul.mubr.bf16.gmra.mrb[0].mxu0 %v984
    %v1023 = vpop.f32.mrb[0].mxu0
    %v1024 = vadd.f32 0.0, %v1023
    %v1025 = vpop.f32.mrb[0].mxu0
    %v1026 = vpop.f32.mrb[0].mxu0
    %v1027 = vpop.f32.mrb[0].mxu0
    %1028 = vdwg.mxu0
    %1030 = vrot.lane.b32.xlu0 %v328, 64
    %v1031 = vpop.permute.xlu0 %1030
    %v1033 = vsel %vm394, %v312, 0
    %v1036 = vsel %vm394, %v1031, 0
    %1038 = vmatprep.subr.bf16.mxu0 0
    %1039 = vmatpush1.bf16.xpose.msra.mxu0 %v1036
    %1040 = vmatprep.subr.bf16.mxu0 0
    %1041 = vmatpush1.bf16.xpose.msra.mxu0 0
    %1042 = vmatprep.subr.bf16.mxu0 0
    %1043 = vmatpush1.bf16.xpose.msra.mxu0 0
    %1044 = vmatprep.subr.bf16.mxu0 0
    %1045 = vmatpush1.bf16.xpose.msra.mxu0 0
    %1046 = vmatprep.subr.bf16.mxu0 0
    %1047 = vmatpush1.bf16.xpose.msra.mxu0 0
    %1048 = vmatprep.subr.bf16.mxu0 0
    %1049 = vmatpush1.bf16.xpose.msra.mxu0 0
    %1050 = vmatprep.subr.bf16.mxu0 0
    %1051 = vmatpush1.bf16.xpose.msra.mxu0 0
    %1052 = vmatprep.subr.bf16.mxu0 0
    %1053 = vmatpush1.bf16.xpose.msra.mxu0 0
    %1054 = vmatprep.subr.bf16.mxu0 0
    %1055 = vmatpush1.bf16.xpose.msra.mxu0 0
    %1056 = vmatprep.subr.bf16.mxu0 0
    %1057 = vmatpush1.bf16.xpose.msra.mxu0 0
    %1058 = vmatprep.subr.bf16.mxu0 0
    %1059 = vmatpush1.bf16.xpose.msra.mxu0 0
    %1060 = vmatprep.subr.bf16.mxu0 0
    %1061 = vmatpush1.bf16.xpose.msra.mxu0 0
    %1062 = vmatprep.subr.bf16.mxu0 0
    %1063 = vmatpush1.bf16.xpose.msra.mxu0 0
    %1064 = vmatprep.subr.bf16.mxu0 0
    %1065 = vmatpush1.bf16.xpose.msra.mxu0 0
    %1066 = vmatprep.subr.bf16.mxu0 0
    %1067 = vmatpush1.bf16.xpose.msra.mxu0 0
    %1068 = vmatprep.subr.bf16.mxu0 0
    %1069 = vmatpush1.bf16.xpose.msra.mxu0 0
    %1070 = vmatprep.mubr.bf16.mxu0 0
    %1071 = vmatmul.mubr.bf16.gmra.mrb[0].mxu0 %v1033
    %v1072 = vpop.f32.mrb[0].mxu0
    %v1073 = vadd.f32 0.0, %v1072
    %v1074 = vpop.f32.mrb[0].mxu0
    %v1075 = vpop.f32.mrb[0].mxu0
    %v1076 = vpop.f32.mrb[0].mxu0
    %1077 = vdwg.mxu0
    %1079 = vrot.lane.b32.xlu0 %v329, 64
    %v1080 = vpop.permute.xlu0 %1079
    %v1082 = vsel %vm394, %v313, 0
    %v1085 = vsel %vm394, %v1080, 0
    %1087 = vmatprep.subr.bf16.mxu0 0
    %1088 = vmatpush1.bf16.xpose.msra.mxu0 %v1085
    %1089 = vmatprep.subr.bf16.mxu0 0
    %1090 = vmatpush1.bf16.xpose.msra.mxu0 0
    %1091 = vmatprep.subr.bf16.mxu0 0
    %1092 = vmatpush1.bf16.xpose.msra.mxu0 0
    %1093 = vmatprep.subr.bf16.mxu0 0
    %1094 = vmatpush1.bf16.xpose.msra.mxu0 0
    %1095 = vmatprep.subr.bf16.mxu0 0
    %1096 = vmatpush1.bf16.xpose.msra.mxu0 0
    %1097 = vmatprep.subr.bf16.mxu0 0
    %1098 = vmatpush1.bf16.xpose.msra.mxu0 0
    %1099 = vmatprep.subr.bf16.mxu0 0
    %1100 = vmatpush1.bf16.xpose.msra.mxu0 0
    %1101 = vmatprep.subr.bf16.mxu0 0
    %1102 = vmatpush1.bf16.xpose.msra.mxu0 0
    %1103 = vmatprep.subr.bf16.mxu0 0
    %1104 = vmatpush1.bf16.xpose.msra.mxu0 0
    %1105 = vmatprep.subr.bf16.mxu0 0
    %1106 = vmatpush1.bf16.xpose.msra.mxu0 0
    %1107 = vmatprep.subr.bf16.mxu0 0
    %1108 = vmatpush1.bf16.xpose.msra.mxu0 0
    %1109 = vmatprep.subr.bf16.mxu0 0
    %1110 = vmatpush1.bf16.xpose.msra.mxu0 0
    %1111 = vmatprep.subr.bf16.mxu0 0
    %1112 = vmatpush1.bf16.xpose.msra.mxu0 0
    %1113 = vmatprep.subr.bf16.mxu0 0
    %1114 = vmatpush1.bf16.xpose.msra.mxu0 0
    %1115 = vmatprep.subr.bf16.mxu0 0
    %1116 = vmatpush1.bf16.xpose.msra.mxu0 0
    %1117 = vmatprep.subr.bf16.mxu0 0
    %1118 = vmatpush1.bf16.xpose.msra.mxu0 0
    %1119 = vmatprep.mubr.bf16.mxu0 0
    %1120 = vmatmul.mubr.bf16.gmra.mrb[0].mxu0 %v1082
    %v1121 = vpop.f32.mrb[0].mxu0
    %v1122 = vadd.f32 0.0, %v1121
    %v1123 = vpop.f32.mrb[0].mxu0
    %v1124 = vpop.f32.mrb[0].mxu0
    %v1125 = vpop.f32.mrb[0].mxu0
    %1126 = vdwg.mxu0
    %1128 = vrot.lane.b32.xlu0 %v330, 64
    %v1129 = vpop.permute.xlu0 %1128
    %v1131 = vsel %vm394, %v314, 0
    %v1134 = vsel %vm394, %v1129, 0
    %1136 = vmatprep.subr.bf16.mxu0 0
    %1137 = vmatpush1.bf16.xpose.msra.mxu0 %v1134
    %1138 = vmatprep.subr.bf16.mxu0 0
    %1139 = vmatpush1.bf16.xpose.msra.mxu0 0
    %1140 = vmatprep.subr.bf16.mxu0 0
    %1141 = vmatpush1.bf16.xpose.msra.mxu0 0
    %1142 = vmatprep.subr.bf16.mxu0 0
    %1143 = vmatpush1.bf16.xpose.msra.mxu0 0
    %1144 = vmatprep.subr.bf16.mxu0 0
    %1145 = vmatpush1.bf16.xpose.msra.mxu0 0
    %1146 = vmatprep.subr.bf16.mxu0 0
    %1147 = vmatpush1.bf16.xpose.msra.mxu0 0
    %1148 = vmatprep.subr.bf16.mxu0 0
    %1149 = vmatpush1.bf16.xpose.msra.mxu0 0
    %1150 = vmatprep.subr.bf16.mxu0 0
    %1151 = vmatpush1.bf16.xpose.msra.mxu0 0
    %1152 = vmatprep.subr.bf16.mxu0 0
    %1153 = vmatpush1.bf16.xpose.msra.mxu0 0
    %1154 = vmatprep.subr.bf16.mxu0 0
    %1155 = vmatpush1.bf16.xpose.msra.mxu0 0
    %1156 = vmatprep.subr.bf16.mxu0 0
    %1157 = vmatpush1.bf16.xpose.msra.mxu0 0
    %1158 = vmatprep.subr.bf16.mxu0 0
    %1159 = vmatpush1.bf16.xpose.msra.mxu0 0
    %1160 = vmatprep.subr.bf16.mxu0 0
    %1161 = vmatpush1.bf16.xpose.msra.mxu0 0
    %1162 = vmatprep.subr.bf16.mxu0 0
    %1163 = vmatpush1.bf16.xpose.msra.mxu0 0
    %1164 = vmatprep.subr.bf16.mxu0 0
    %1165 = vmatpush1.bf16.xpose.msra.mxu0 0
    %1166 = vmatprep.subr.bf16.mxu0 0
    %1167 = vmatpush1.bf16.xpose.msra.mxu0 0
    %1168 = vmatprep.mubr.bf16.mxu0 0
    %1169 = vmatmul.mubr.bf16.gmra.mrb[0].mxu0 %v1131
    %v1170 = vpop.f32.mrb[0].mxu0
    %v1171 = vadd.f32 0.0, %v1170
    %v1172 = vpop.f32.mrb[0].mxu0
    %v1173 = vpop.f32.mrb[0].mxu0
    %v1174 = vpop.f32.mrb[0].mxu0
    %1175 = vdwg.mxu0
    %v1176 = vsel %vm394, %v436, -inf
    %1177 = vmax.xlane.f32.xlu0 %v1176
    %v1178 = vpop.xlane.xlu0 %1177
    %v1179 = vsel %vm394, %v485, -inf
    %1180 = vmax.xlane.f32.xlu0 %v1179
    %v1181 = vpop.xlane.xlu0 %1180
    %v1182 = vsel %vm394, %v534, -inf
    %1183 = vmax.xlane.f32.xlu0 %v1182
    %v1184 = vpop.xlane.xlu0 %1183
    %v1185 = vsel %vm394, %v583, -inf
    %1186 = vmax.xlane.f32.xlu0 %v1185
    %v1187 = vpop.xlane.xlu0 %1186
    %v1188 = vsel %vm394, %v632, -inf
    %1189 = vmax.xlane.f32.xlu0 %v1188
    %v1190 = vpop.xlane.xlu0 %1189
    %v1191 = vsel %vm394, %v681, -inf
    %1192 = vmax.xlane.f32.xlu0 %v1191
    %v1193 = vpop.xlane.xlu0 %1192
    %v1194 = vsel %vm394, %v730, -inf
    %1195 = vmax.xlane.f32.xlu0 %v1194
    %v1196 = vpop.xlane.xlu0 %1195
    %v1197 = vsel %vm394, %v779, -inf
    %1198 = vmax.xlane.f32.xlu0 %v1197
    %v1199 = vpop.xlane.xlu0 %1198
    %v1200 = vsel %vm394, %v828, -inf
    %1201 = vmax.xlane.f32.xlu0 %v1200
    %v1202 = vpop.xlane.xlu0 %1201
    %v1203 = vsel %vm394, %v877, -inf
    %1204 = vmax.xlane.f32.xlu0 %v1203
    %v1205 = vpop.xlane.xlu0 %1204
    %v1206 = vsel %vm394, %v926, -inf
    %1207 = vmax.xlane.f32.xlu0 %v1206
    %v1208 = vpop.xlane.xlu0 %1207
    %v1209 = vsel %vm394, %v975, -inf
    %1210 = vmax.xlane.f32.xlu0 %v1209
    %v1211 = vpop.xlane.xlu0 %1210
    %v1212 = vsel %vm394, %v1024, -inf
    %1213 = vmax.xlane.f32.xlu0 %v1212
    %v1214 = vpop.xlane.xlu0 %1213
    %v1215 = vsel %vm394, %v1073, -inf
    %1216 = vmax.xlane.f32.xlu0 %v1215
    %v1217 = vpop.xlane.xlu0 %1216
    %v1218 = vsel %vm394, %v1122, -inf
    %1219 = vmax.xlane.f32.xlu0 %v1218
    %v1220 = vpop.xlane.xlu0 %1219
    %v1221 = vsel %vm394, %v1171, -inf
    %1222 = vmax.xlane.f32.xlu0 %v1221
    %v1223 = vpop.xlane.xlu0 %1222
    %v1224 = vsub.f32 %v436, %v1178
    %v1225 = vsub.f32 %v485, %v1181
    %v1226 = vsub.f32 %v534, %v1184
    %v1227 = vsub.f32 %v583, %v1187
    %v1228 = vsub.f32 %v632, %v1190
    %v1229 = vsub.f32 %v681, %v1193
    %v1230 = vsub.f32 %v730, %v1196
    %v1231 = vsub.f32 %v779, %v1199
    %v1232 = vsub.f32 %v828, %v1202
    %v1233 = vsub.f32 %v877, %v1205
    %v1234 = vsub.f32 %v926, %v1208
    %v1235 = vsub.f32 %v975, %v1211
    %v1236 = vsub.f32 %v1024, %v1214
    %v1237 = vsub.f32 %v1073, %v1217
    %v1238 = vsub.f32 %v1122, %v1220
    %v1239 = vsub.f32 %v1171, %v1223
    %v1240 = vmul.f32 %v1224, 1.442695
    %v1241 = vpow.pop %v1240
    %v1242 = vmul.f32 %v1225, 1.442695
    %v1243 = vpow.pop %v1242
    %v1244 = vmul.f32 %v1226, 1.442695
    %v1245 = vpow.pop %v1244
    %v1246 = vmul.f32 %v1227, 1.442695
    %v1247 = vpow.pop %v1246
    %v1248 = vmul.f32 %v1228, 1.442695
    %v1249 = vpow.pop %v1248
    %v1250 = vmul.f32 %v1229, 1.442695
    %v1251 = vpow.pop %v1250
    %v1252 = vmul.f32 %v1230, 1.442695
    %v1253 = vpow.pop %v1252
    %v1254 = vmul.f32 %v1231, 1.442695
    %v1255 = vpow.pop %v1254
    %v1256 = vmul.f32 %v1232, 1.442695
    %v1257 = vpow.pop %v1256
    %v1258 = vmul.f32 %v1233, 1.442695
    %v1259 = vpow.pop %v1258
    %v1260 = vmul.f32 %v1234, 1.442695
    %v1261 = vpow.pop %v1260
    %v1262 = vmul.f32 %v1235, 1.442695
    %v1263 = vpow.pop %v1262
    %v1264 = vmul.f32 %v1236, 1.442695
    %v1265 = vpow.pop %v1264
    %v1266 = vmul.f32 %v1237, 1.442695
    %v1267 = vpow.pop %v1266
    %v1268 = vmul.f32 %v1238, 1.442695
    %v1269 = vpow.pop %v1268
    %v1270 = vmul.f32 %v1239, 1.442695
    %v1271 = vpow.pop %v1270
    %v1272 = vsel %vm394, %v1241, 0.0
    %1273 = vadd.xlane.f32.xlu0 %v1272
    %v1274 = vpop.xlane.xlu0 %1273
    %v1275 = vsel %vm394, %v1243, 0.0
    %1276 = vadd.xlane.f32.xlu0 %v1275
    %v1277 = vpop.xlane.xlu0 %1276
    %v1278 = vsel %vm394, %v1245, 0.0
    %1279 = vadd.xlane.f32.xlu0 %v1278
    %v1280 = vpop.xlane.xlu0 %1279
    %v1281 = vsel %vm394, %v1247, 0.0
    %1282 = vadd.xlane.f32.xlu0 %v1281
    %v1283 = vpop.xlane.xlu0 %1282
    %v1284 = vsel %vm394, %v1249, 0.0
    %1285 = vadd.xlane.f32.xlu0 %v1284
    %v1286 = vpop.xlane.xlu0 %1285
    %v1287 = vsel %vm394, %v1251, 0.0
    %1288 = vadd.xlane.f32.xlu0 %v1287
    %v1289 = vpop.xlane.xlu0 %1288
    %v1290 = vsel %vm394, %v1253, 0.0
    %1291 = vadd.xlane.f32.xlu0 %v1290
    %v1292 = vpop.xlane.xlu0 %1291
    %v1293 = vsel %vm394, %v1255, 0.0
    %1294 = vadd.xlane.f32.xlu0 %v1293
    %v1295 = vpop.xlane.xlu0 %1294
    %v1296 = vsel %vm394, %v1257, 0.0
    %1297 = vadd.xlane.f32.xlu0 %v1296
    %v1298 = vpop.xlane.xlu0 %1297
    %v1299 = vsel %vm394, %v1259, 0.0
    %1300 = vadd.xlane.f32.xlu0 %v1299
    %v1301 = vpop.xlane.xlu0 %1300
    %v1302 = vsel %vm394, %v1261, 0.0
    %1303 = vadd.xlane.f32.xlu0 %v1302
    %v1304 = vpop.xlane.xlu0 %1303
    %v1305 = vsel %vm394, %v1263, 0.0
    %1306 = vadd.xlane.f32.xlu0 %v1305
    %v1307 = vpop.xlane.xlu0 %1306
    %v1308 = vsel %vm394, %v1265, 0.0
    %1309 = vadd.xlane.f32.xlu0 %v1308
    %v1310 = vpop.xlane.xlu0 %1309
    %v1311 = vsel %vm394, %v1267, 0.0
    %1312 = vadd.xlane.f32.xlu0 %v1311
    %v1313 = vpop.xlane.xlu0 %1312
    %v1314 = vsel %vm394, %v1269, 0.0
    %1315 = vadd.xlane.f32.xlu0 %v1314
    %v1316 = vpop.xlane.xlu0 %1315
    %v1317 = vsel %vm394, %v1271, 0.0
    %1318 = vadd.xlane.f32.xlu0 %v1317
    %v1319 = vpop.xlane.xlu0 %1318
    %v1320 = vrcp.pop %v1274
    %v1321 = vrcp.pop %v1277
    %v1322 = vrcp.pop %v1280
    %v1323 = vrcp.pop %v1283
    %v1324 = vrcp.pop %v1286
    %v1325 = vrcp.pop %v1289
    %v1326 = vrcp.pop %v1292
    %v1327 = vrcp.pop %v1295
    %v1328 = vrcp.pop %v1298
    %v1329 = vrcp.pop %v1301
    %v1330 = vrcp.pop %v1304
    %v1331 = vrcp.pop %v1307
    %v1332 = vrcp.pop %v1310
    %v1333 = vrcp.pop %v1313
    %v1334 = vrcp.pop %v1316
    %v1335 = vrcp.pop %v1319
    %v1336 = vmul.f32 %v1241, %v1320
    %v1337 = vmul.f32 %v1243, %v1321
    %v1338 = vmul.f32 %v1245, %v1322
    %v1339 = vmul.f32 %v1247, %v1323
    %v1340 = vmul.f32 %v1249, %v1324
    %v1341 = vmul.f32 %v1251, %v1325
    %v1342 = vmul.f32 %v1253, %v1326
    %v1343 = vmul.f32 %v1255, %v1327
    %v1344 = vmul.f32 %v1257, %v1328
    %v1345 = vmul.f32 %v1259, %v1329
    %v1346 = vmul.f32 %v1261, %v1330
    %v1347 = vmul.f32 %v1263, %v1331
    %v1348 = vmul.f32 %v1265, %v1332
    %v1349 = vmul.f32 %v1267, %v1333
    %v1350 = vmul.f32 %v1269, %v1334
    %v1351 = vmul.f32 %v1271, %v1335
    %v1352 = vpack.c.bf16 %v1336, %v1336
    %v1353 = vpack.c.bf16 %v1337, %v1337
    %v1354 = vpack.c.bf16 %v1338, %v1338
    %v1355 = vpack.c.bf16 %v1339, %v1339
    %v1356 = vpack.c.bf16 %v1340, %v1340
    %v1357 = vpack.c.bf16 %v1341, %v1341
    %v1358 = vpack.c.bf16 %v1342, %v1342
    %v1359 = vpack.c.bf16 %v1343, %v1343
    %v1360 = vpack.c.bf16 %v1344, %v1344
    %v1361 = vpack.c.bf16 %v1345, %v1345
    %v1362 = vpack.c.bf16 %v1346, %v1346
    %v1363 = vpack.c.bf16 %v1347, %v1347
    %v1364 = vpack.c.bf16 %v1348, %v1348
    %v1365 = vpack.c.bf16 %v1349, %v1349
    %v1366 = vpack.c.bf16 %v1350, %v1350
    %v1367 = vpack.c.bf16 %v1351, %v1351
    %v1369 = vsel %vm394, %v1352, 0
    %vm1371 = vcmask 1043456
    %v1373 = vsel %vm1371, %v375, 0
    %1375 = vmatprep.subr.bf16.mxu0 0
    %1376 = vmatpush1.bf16.msra.mxu0 %v1373
    %1377 = vmatprep.subr.bf16.mxu0 0
    %1378 = vmatpush1.bf16.msra.mxu0 0
    %1379 = vmatprep.subr.bf16.mxu0 0
    %1380 = vmatpush1.bf16.msra.mxu0 0
    %1381 = vmatprep.subr.bf16.mxu0 0
    %1382 = vmatpush1.bf16.msra.mxu0 0
    %1383 = vmatprep.subr.bf16.mxu0 0
    %1384 = vmatpush1.bf16.msra.mxu0 0
    %1385 = vmatprep.subr.bf16.mxu0 0
    %1386 = vmatpush1.bf16.msra.mxu0 0
    %1387 = vmatprep.subr.bf16.mxu0 0
    %1388 = vmatpush1.bf16.msra.mxu0 0
    %1389 = vmatprep.subr.bf16.mxu0 0
    %1390 = vmatpush1.bf16.msra.mxu0 0
    %1391 = vmatprep.subr.bf16.mxu0 0
    %1392 = vmatpush1.bf16.msra.mxu0 0
    %1393 = vmatprep.subr.bf16.mxu0 0
    %1394 = vmatpush1.bf16.msra.mxu0 0
    %1395 = vmatprep.subr.bf16.mxu0 0
    %1396 = vmatpush1.bf16.msra.mxu0 0
    %1397 = vmatprep.subr.bf16.mxu0 0
    %1398 = vmatpush1.bf16.msra.mxu0 0
    %1399 = vmatprep.subr.bf16.mxu0 0
    %1400 = vmatpush1.bf16.msra.mxu0 0
    %1401 = vmatprep.subr.bf16.mxu0 0
    %1402 = vmatpush1.bf16.msra.mxu0 0
    %1403 = vmatprep.subr.bf16.mxu0 0
    %1404 = vmatpush1.bf16.msra.mxu0 0
    %1405 = vmatprep.subr.bf16.mxu0 0
    %1406 = vmatpush1.bf16.msra.mxu0 0
    %1407 = vmatprep.mubr.bf16.mxu0 0
    %1408 = vmatmul.mubr.bf16.gmra.mrb[0].mxu0 %v1369
    %v1409 = vpop.f32.mrb[0].mxu0
    %v1410 = vadd.f32 0.0, %v1409
    %v1411 = vpop.f32.mrb[0].mxu0
    %v1412 = vpop.f32.mrb[0].mxu0
    %v1413 = vpop.f32.mrb[0].mxu0
    %1414 = vdwg.mxu0
    %v1416 = vsel %vm394, %v1353, 0
    %v1419 = vsel %vm1371, %v376, 0
    %1421 = vmatprep.subr.bf16.mxu0 0
    %1422 = vmatpush1.bf16.msra.mxu0 %v1419
    %1423 = vmatprep.subr.bf16.mxu0 0
    %1424 = vmatpush1.bf16.msra.mxu0 0
    %1425 = vmatprep.subr.bf16.mxu0 0
    %1426 = vmatpush1.bf16.msra.mxu0 0
    %1427 = vmatprep.subr.bf16.mxu0 0
    %1428 = vmatpush1.bf16.msra.mxu0 0
    %1429 = vmatprep.subr.bf16.mxu0 0
    %1430 = vmatpush1.bf16.msra.mxu0 0
    %1431 = vmatprep.subr.bf16.mxu0 0
    %1432 = vmatpush1.bf16.msra.mxu0 0
    %1433 = vmatprep.subr.bf16.mxu0 0
    %1434 = vmatpush1.bf16.msra.mxu0 0
    %1435 = vmatprep.subr.bf16.mxu0 0
    %1436 = vmatpush1.bf16.msra.mxu0 0
    %1437 = vmatprep.subr.bf16.mxu0 0
    %1438 = vmatpush1.bf16.msra.mxu0 0
    %1439 = vmatprep.subr.bf16.mxu0 0
    %1440 = vmatpush1.bf16.msra.mxu0 0
    %1441 = vmatprep.subr.bf16.mxu0 0
    %1442 = vmatpush1.bf16.msra.mxu0 0
    %1443 = vmatprep.subr.bf16.mxu0 0
    %1444 = vmatpush1.bf16.msra.mxu0 0
    %1445 = vmatprep.subr.bf16.mxu0 0
    %1446 = vmatpush1.bf16.msra.mxu0 0
    %1447 = vmatprep.subr.bf16.mxu0 0
    %1448 = vmatpush1.bf16.msra.mxu0 0
    %1449 = vmatprep.subr.bf16.mxu0 0
    %1450 = vmatpush1.bf16.msra.mxu0 0
    %1451 = vmatprep.subr.bf16.mxu0 0
    %1452 = vmatpush1.bf16.msra.mxu0 0
    %1453 = vmatprep.mubr.bf16.mxu0 0
    %1454 = vmatmul.mubr.bf16.gmra.mrb[0].mxu0 %v1416
    %v1455 = vpop.f32.mrb[0].mxu0
    %v1456 = vadd.f32 0.0, %v1455
    %v1457 = vpop.f32.mrb[0].mxu0
    %v1458 = vpop.f32.mrb[0].mxu0
    %v1459 = vpop.f32.mrb[0].mxu0
    %1460 = vdwg.mxu0
    %v1462 = vsel %vm394, %v1354, 0
    %v1465 = vsel %vm1371, %v377, 0
    %1467 = vmatprep.subr.bf16.mxu0 0
    %1468 = vmatpush1.bf16.msra.mxu0 %v1465
    %1469 = vmatprep.subr.bf16.mxu0 0
    %1470 = vmatpush1.bf16.msra.mxu0 0
    %1471 = vmatprep.subr.bf16.mxu0 0
    %1472 = vmatpush1.bf16.msra.mxu0 0
    %1473 = vmatprep.subr.bf16.mxu0 0
    %1474 = vmatpush1.bf16.msra.mxu0 0
    %1475 = vmatprep.subr.bf16.mxu0 0
    %1476 = vmatpush1.bf16.msra.mxu0 0
    %1477 = vmatprep.subr.bf16.mxu0 0
    %1478 = vmatpush1.bf16.msra.mxu0 0
    %1479 = vmatprep.subr.bf16.mxu0 0
    %1480 = vmatpush1.bf16.msra.mxu0 0
    %1481 = vmatprep.subr.bf16.mxu0 0
    %1482 = vmatpush1.bf16.msra.mxu0 0
    %1483 = vmatprep.subr.bf16.mxu0 0
    %1484 = vmatpush1.bf16.msra.mxu0 0
    %1485 = vmatprep.subr.bf16.mxu0 0
    %1486 = vmatpush1.bf16.msra.mxu0 0
    %1487 = vmatprep.subr.bf16.mxu0 0
    %1488 = vmatpush1.bf16.msra.mxu0 0
    %1489 = vmatprep.subr.bf16.mxu0 0
    %1490 = vmatpush1.bf16.msra.mxu0 0
    %1491 = vmatprep.subr.bf16.mxu0 0
    %1492 = vmatpush1.bf16.msra.mxu0 0
    %1493 = vmatprep.subr.bf16.mxu0 0
    %1494 = vmatpush1.bf16.msra.mxu0 0
    %1495 = vmatprep.subr.bf16.mxu0 0
    %1496 = vmatpush1.bf16.msra.mxu0 0
    %1497 = vmatprep.subr.bf16.mxu0 0
    %1498 = vmatpush1.bf16.msra.mxu0 0
    %1499 = vmatprep.mubr.bf16.mxu0 0
    %1500 = vmatmul.mubr.bf16.gmra.mrb[0].mxu0 %v1462
    %v1501 = vpop.f32.mrb[0].mxu0
    %v1502 = vadd.f32 0.0, %v1501
    %v1503 = vpop.f32.mrb[0].mxu0
    %v1504 = vpop.f32.mrb[0].mxu0
    %v1505 = vpop.f32.mrb[0].mxu0
    %1506 = vdwg.mxu0
    %v1508 = vsel %vm394, %v1355, 0
    %v1511 = vsel %vm1371, %v378, 0
    %1513 = vmatprep.subr.bf16.mxu0 0
    %1514 = vmatpush1.bf16.msra.mxu0 %v1511
    %1515 = vmatprep.subr.bf16.mxu0 0
    %1516 = vmatpush1.bf16.msra.mxu0 0
    %1517 = vmatprep.subr.bf16.mxu0 0
    %1518 = vmatpush1.bf16.msra.mxu0 0
    %1519 = vmatprep.subr.bf16.mxu0 0
    %1520 = vmatpush1.bf16.msra.mxu0 0
    %1521 = vmatprep.subr.bf16.mxu0 0
    %1522 = vmatpush1.bf16.msra.mxu0 0
    %1523 = vmatprep.subr.bf16.mxu0 0
    %1524 = vmatpush1.bf16.msra.mxu0 0
    %1525 = vmatprep.subr.bf16.mxu0 0
    %1526 = vmatpush1.bf16.msra.mxu0 0
    %1527 = vmatprep.subr.bf16.mxu0 0
    %1528 = vmatpush1.bf16.msra.mxu0 0
    %1529 = vmatprep.subr.bf16.mxu0 0
    %1530 = vmatpush1.bf16.msra.mxu0 0
    %1531 = vmatprep.subr.bf16.mxu0 0
    %1532 = vmatpush1.bf16.msra.mxu0 0
    %1533 = vmatprep.subr.bf16.mxu0 0
    %1534 = vmatpush1.bf16.msra.mxu0 0
    %1535 = vmatprep.subr.bf16.mxu0 0
    %1536 = vmatpush1.bf16.msra.mxu0 0
    %1537 = vmatprep.subr.bf16.mxu0 0
    %1538 = vmatpush1.bf16.msra.mxu0 0
    %1539 = vmatprep.subr.bf16.mxu0 0
    %1540 = vmatpush1.bf16.msra.mxu0 0
    %1541 = vmatprep.subr.bf16.mxu0 0
    %1542 = vmatpush1.bf16.msra.mxu0 0
    %1543 = vmatprep.subr.bf16.mxu0 0
    %1544 = vmatpush1.bf16.msra.mxu0 0
    %1545 = vmatprep.mubr.bf16.mxu0 0
    %1546 = vmatmul.mubr.bf16.gmra.mrb[0].mxu0 %v1508
    %v1547 = vpop.f32.mrb[0].mxu0
    %v1548 = vadd.f32 0.0, %v1547
    %v1549 = vpop.f32.mrb[0].mxu0
    %v1550 = vpop.f32.mrb[0].mxu0
    %v1551 = vpop.f32.mrb[0].mxu0
    %1552 = vdwg.mxu0
    %v1554 = vsel %vm394, %v1356, 0
    %v1557 = vsel %vm1371, %v379, 0
    %1559 = vmatprep.subr.bf16.mxu0 0
    %1560 = vmatpush1.bf16.msra.mxu0 %v1557
    %1561 = vmatprep.subr.bf16.mxu0 0
    %1562 = vmatpush1.bf16.msra.mxu0 0
    %1563 = vmatprep.subr.bf16.mxu0 0
    %1564 = vmatpush1.bf16.msra.mxu0 0
    %1565 = vmatprep.subr.bf16.mxu0 0
    %1566 = vmatpush1.bf16.msra.mxu0 0
    %1567 = vmatprep.subr.bf16.mxu0 0
    %1568 = vmatpush1.bf16.msra.mxu0 0
    %1569 = vmatprep.subr.bf16.mxu0 0
    %1570 = vmatpush1.bf16.msra.mxu0 0
    %1571 = vmatprep.subr.bf16.mxu0 0
    %1572 = vmatpush1.bf16.msra.mxu0 0
    %1573 = vmatprep.subr.bf16.mxu0 0
    %1574 = vmatpush1.bf16.msra.mxu0 0
    %1575 = vmatprep.subr.bf16.mxu0 0
    %1576 = vmatpush1.bf16.msra.mxu0 0
    %1577 = vmatprep.subr.bf16.mxu0 0
    %1578 = vmatpush1.bf16.msra.mxu0 0
    %1579 = vmatprep.subr.bf16.mxu0 0
    %1580 = vmatpush1.bf16.msra.mxu0 0
    %1581 = vmatprep.subr.bf16.mxu0 0
    %1582 = vmatpush1.bf16.msra.mxu0 0
    %1583 = vmatprep.subr.bf16.mxu0 0
    %1584 = vmatpush1.bf16.msra.mxu0 0
    %1585 = vmatprep.subr.bf16.mxu0 0
    %1586 = vmatpush1.bf16.msra.mxu0 0
    %1587 = vmatprep.subr.bf16.mxu0 0
    %1588 = vmatpush1.bf16.msra.mxu0 0
    %1589 = vmatprep.subr.bf16.mxu0 0
    %1590 = vmatpush1.bf16.msra.mxu0 0
    %1591 = vmatprep.mubr.bf16.mxu0 0
    %1592 = vmatmul.mubr.bf16.gmra.mrb[0].mxu0 %v1554
    %v1593 = vpop.f32.mrb[0].mxu0
    %v1594 = vadd.f32 0.0, %v1593
    %v1595 = vpop.f32.mrb[0].mxu0
    %v1596 = vpop.f32.mrb[0].mxu0
    %v1597 = vpop.f32.mrb[0].mxu0
    %1598 = vdwg.mxu0
    %v1600 = vsel %vm394, %v1357, 0
    %v1603 = vsel %vm1371, %v380, 0
    %1605 = vmatprep.subr.bf16.mxu0 0
    %1606 = vmatpush1.bf16.msra.mxu0 %v1603
    %1607 = vmatprep.subr.bf16.mxu0 0
    %1608 = vmatpush1.bf16.msra.mxu0 0
    %1609 = vmatprep.subr.bf16.mxu0 0
    %1610 = vmatpush1.bf16.msra.mxu0 0
    %1611 = vmatprep.subr.bf16.mxu0 0
    %1612 = vmatpush1.bf16.msra.mxu0 0
    %1613 = vmatprep.subr.bf16.mxu0 0
    %1614 = vmatpush1.bf16.msra.mxu0 0
    %1615 = vmatprep.subr.bf16.mxu0 0
    %1616 = vmatpush1.bf16.msra.mxu0 0
    %1617 = vmatprep.subr.bf16.mxu0 0
    %1618 = vmatpush1.bf16.msra.mxu0 0
    %1619 = vmatprep.subr.bf16.mxu0 0
    %1620 = vmatpush1.bf16.msra.mxu0 0
    %1621 = vmatprep.subr.bf16.mxu0 0
    %1622 = vmatpush1.bf16.msra.mxu0 0
    %1623 = vmatprep.subr.bf16.mxu0 0
    %1624 = vmatpush1.bf16.msra.mxu0 0
    %1625 = vmatprep.subr.bf16.mxu0 0
    %1626 = vmatpush1.bf16.msra.mxu0 0
    %1627 = vmatprep.subr.bf16.mxu0 0
    %1628 = vmatpush1.bf16.msra.mxu0 0
    %1629 = vmatprep.subr.bf16.mxu0 0
    %1630 = vmatpush1.bf16.msra.mxu0 0
    %1631 = vmatprep.subr.bf16.mxu0 0
    %1632 = vmatpush1.bf16.msra.mxu0 0
    %1633 = vmatprep.subr.bf16.mxu0 0
    %1634 = vmatpush1.bf16.msra.mxu0 0
    %1635 = vmatprep.subr.bf16.mxu0 0
    %1636 = vmatpush1.bf16.msra.mxu0 0
    %1637 = vmatprep.mubr.bf16.mxu0 0
    %1638 = vmatmul.mubr.bf16.gmra.mrb[0].mxu0 %v1600
    %v1639 = vpop.f32.mrb[0].mxu0
    %v1640 = vadd.f32 0.0, %v1639
    %v1641 = vpop.f32.mrb[0].mxu0
    %v1642 = vpop.f32.mrb[0].mxu0
    %v1643 = vpop.f32.mrb[0].mxu0
    %1644 = vdwg.mxu0
    %v1646 = vsel %vm394, %v1358, 0
    %v1649 = vsel %vm1371, %v381, 0
    %1651 = vmatprep.subr.bf16.mxu0 0
    %1652 = vmatpush1.bf16.msra.mxu0 %v1649
    %1653 = vmatprep.subr.bf16.mxu0 0
    %1654 = vmatpush1.bf16.msra.mxu0 0
    %1655 = vmatprep.subr.bf16.mxu0 0
    %1656 = vmatpush1.bf16.msra.mxu0 0
    %1657 = vmatprep.subr.bf16.mxu0 0
    %1658 = vmatpush1.bf16.msra.mxu0 0
    %1659 = vmatprep.subr.bf16.mxu0 0
    %1660 = vmatpush1.bf16.msra.mxu0 0
    %1661 = vmatprep.subr.bf16.mxu0 0
    %1662 = vmatpush1.bf16.msra.mxu0 0
    %1663 = vmatprep.subr.bf16.mxu0 0
    %1664 = vmatpush1.bf16.msra.mxu0 0
    %1665 = vmatprep.subr.bf16.mxu0 0
    %1666 = vmatpush1.bf16.msra.mxu0 0
    %1667 = vmatprep.subr.bf16.mxu0 0
    %1668 = vmatpush1.bf16.msra.mxu0 0
    %1669 = vmatprep.subr.bf16.mxu0 0
    %1670 = vmatpush1.bf16.msra.mxu0 0
    %1671 = vmatprep.subr.bf16.mxu0 0
    %1672 = vmatpush1.bf16.msra.mxu0 0
    %1673 = vmatprep.subr.bf16.mxu0 0
    %1674 = vmatpush1.bf16.msra.mxu0 0
    %1675 = vmatprep.subr.bf16.mxu0 0
    %1676 = vmatpush1.bf16.msra.mxu0 0
    %1677 = vmatprep.subr.bf16.mxu0 0
    %1678 = vmatpush1.bf16.msra.mxu0 0
    %1679 = vmatprep.subr.bf16.mxu0 0
    %1680 = vmatpush1.bf16.msra.mxu0 0
    %1681 = vmatprep.subr.bf16.mxu0 0
    %1682 = vmatpush1.bf16.msra.mxu0 0
    %1683 = vmatprep.mubr.bf16.mxu0 0
    %1684 = vmatmul.mubr.bf16.gmra.mrb[0].mxu0 %v1646
    %v1685 = vpop.f32.mrb[0].mxu0
    %v1686 = vadd.f32 0.0, %v1685
    %v1687 = vpop.f32.mrb[0].mxu0
    %v1688 = vpop.f32.mrb[0].mxu0
    %v1689 = vpop.f32.mrb[0].mxu0
    %1690 = vdwg.mxu0
    %v1692 = vsel %vm394, %v1359, 0
    %v1695 = vsel %vm1371, %v382, 0
    %1697 = vmatprep.subr.bf16.mxu0 0
    %1698 = vmatpush1.bf16.msra.mxu0 %v1695
    %1699 = vmatprep.subr.bf16.mxu0 0
    %1700 = vmatpush1.bf16.msra.mxu0 0
    %1701 = vmatprep.subr.bf16.mxu0 0
    %1702 = vmatpush1.bf16.msra.mxu0 0
    %1703 = vmatprep.subr.bf16.mxu0 0
    %1704 = vmatpush1.bf16.msra.mxu0 0
    %1705 = vmatprep.subr.bf16.mxu0 0
    %1706 = vmatpush1.bf16.msra.mxu0 0
    %1707 = vmatprep.subr.bf16.mxu0 0
    %1708 = vmatpush1.bf16.msra.mxu0 0
    %1709 = vmatprep.subr.bf16.mxu0 0
    %1710 = vmatpush1.bf16.msra.mxu0 0
    %1711 = vmatprep.subr.bf16.mxu0 0
    %1712 = vmatpush1.bf16.msra.mxu0 0
    %1713 = vmatprep.subr.bf16.mxu0 0
    %1714 = vmatpush1.bf16.msra.mxu0 0
    %1715 = vmatprep.subr.bf16.mxu0 0
    %1716 = vmatpush1.bf16.msra.mxu0 0
    %1717 = vmatprep.subr.bf16.mxu0 0
    %1718 = vmatpush1.bf16.msra.mxu0 0
    %1719 = vmatprep.subr.bf16.mxu0 0
    %1720 = vmatpush1.bf16.msra.mxu0 0
    %1721 = vmatprep.subr.bf16.mxu0 0
    %1722 = vmatpush1.bf16.msra.mxu0 0
    %1723 = vmatprep.subr.bf16.mxu0 0
    %1724 = vmatpush1.bf16.msra.mxu0 0
    %1725 = vmatprep.subr.bf16.mxu0 0
    %1726 = vmatpush1.bf16.msra.mxu0 0
    %1727 = vmatprep.subr.bf16.mxu0 0
    %1728 = vmatpush1.bf16.msra.mxu0 0
    %1729 = vmatprep.mubr.bf16.mxu0 0
    %1730 = vmatmul.mubr.bf16.gmra.mrb[0].mxu0 %v1692
    %v1731 = vpop.f32.mrb[0].mxu0
    %v1732 = vadd.f32 0.0, %v1731
    %v1733 = vpop.f32.mrb[0].mxu0
    %v1734 = vpop.f32.mrb[0].mxu0
    %v1735 = vpop.f32.mrb[0].mxu0
    %1736 = vdwg.mxu0
    %v1738 = vsel %vm394, %v1360, 0
    %v1741 = vsel %vm1371, %v383, 0
    %1743 = vmatprep.subr.bf16.mxu0 0
    %1744 = vmatpush1.bf16.msra.mxu0 %v1741
    %1745 = vmatprep.subr.bf16.mxu0 0
    %1746 = vmatpush1.bf16.msra.mxu0 0
    %1747 = vmatprep.subr.bf16.mxu0 0
    %1748 = vmatpush1.bf16.msra.mxu0 0
    %1749 = vmatprep.subr.bf16.mxu0 0
    %1750 = vmatpush1.bf16.msra.mxu0 0
    %1751 = vmatprep.subr.bf16.mxu0 0
    %1752 = vmatpush1.bf16.msra.mxu0 0
    %1753 = vmatprep.subr.bf16.mxu0 0
    %1754 = vmatpush1.bf16.msra.mxu0 0
    %1755 = vmatprep.subr.bf16.mxu0 0
    %1756 = vmatpush1.bf16.msra.mxu0 0
    %1757 = vmatprep.subr.bf16.mxu0 0
    %1758 = vmatpush1.bf16.msra.mxu0 0
    %1759 = vmatprep.subr.bf16.mxu0 0
    %1760 = vmatpush1.bf16.msra.mxu0 0
    %1761 = vmatprep.subr.bf16.mxu0 0
    %1762 = vmatpush1.bf16.msra.mxu0 0
    %1763 = vmatprep.subr.bf16.mxu0 0
    %1764 = vmatpush1.bf16.msra.mxu0 0
    %1765 = vmatprep.subr.bf16.mxu0 0
    %1766 = vmatpush1.bf16.msra.mxu0 0
    %1767 = vmatprep.subr.bf16.mxu0 0
    %1768 = vmatpush1.bf16.msra.mxu0 0
    %1769 = vmatprep.subr.bf16.mxu0 0
    %1770 = vmatpush1.bf16.msra.mxu0 0
    %1771 = vmatprep.subr.bf16.mxu0 0
    %1772 = vmatpush1.bf16.msra.mxu0 0
    %1773 = vmatprep.subr.bf16.mxu0 0
    %1774 = vmatpush1.bf16.msra.mxu0 0
    %1775 = vmatprep.mubr.bf16.mxu0 0
    %1776 = vmatmul.mubr.bf16.gmra.mrb[0].mxu0 %v1738
    %v1777 = vpop.f32.mrb[0].mxu0
    %v1778 = vadd.f32 0.0, %v1777
    %v1779 = vpop.f32.mrb[0].mxu0
    %v1780 = vpop.f32.mrb[0].mxu0
    %v1781 = vpop.f32.mrb[0].mxu0
    %1782 = vdwg.mxu0
    %v1784 = vsel %vm394, %v1361, 0
    %v1787 = vsel %vm1371, %v384, 0
    %1789 = vmatprep.subr.bf16.mxu0 0
    %1790 = vmatpush1.bf16.msra.mxu0 %v1787
    %1791 = vmatprep.subr.bf16.mxu0 0
    %1792 = vmatpush1.bf16.msra.mxu0 0
    %1793 = vmatprep.subr.bf16.mxu0 0
    %1794 = vmatpush1.bf16.msra.mxu0 0
    %1795 = vmatprep.subr.bf16.mxu0 0
    %1796 = vmatpush1.bf16.msra.mxu0 0
    %1797 = vmatprep.subr.bf16.mxu0 0
    %1798 = vmatpush1.bf16.msra.mxu0 0
    %1799 = vmatprep.subr.bf16.mxu0 0
    %1800 = vmatpush1.bf16.msra.mxu0 0
    %1801 = vmatprep.subr.bf16.mxu0 0
    %1802 = vmatpush1.bf16.msra.mxu0 0
    %1803 = vmatprep.subr.bf16.mxu0 0
    %1804 = vmatpush1.bf16.msra.mxu0 0
    %1805 = vmatprep.subr.bf16.mxu0 0
    %1806 = vmatpush1.bf16.msra.mxu0 0
    %1807 = vmatprep.subr.bf16.mxu0 0
    %1808 = vmatpush1.bf16.msra.mxu0 0
    %1809 = vmatprep.subr.bf16.mxu0 0
    %1810 = vmatpush1.bf16.msra.mxu0 0
    %1811 = vmatprep.subr.bf16.mxu0 0
    %1812 = vmatpush1.bf16.msra.mxu0 0
    %1813 = vmatprep.subr.bf16.mxu0 0
    %1814 = vmatpush1.bf16.msra.mxu0 0
    %1815 = vmatprep.subr.bf16.mxu0 0
    %1816 = vmatpush1.bf16.msra.mxu0 0
    %1817 = vmatprep.subr.bf16.mxu0 0
    %1818 = vmatpush1.bf16.msra.mxu0 0
    %1819 = vmatprep.subr.bf16.mxu0 0
    %1820 = vmatpush1.bf16.msra.mxu0 0
    %1821 = vmatprep.mubr.bf16.mxu0 0
    %1822 = vmatmul.mubr.bf16.gmra.mrb[0].mxu0 %v1784
    %v1823 = vpop.f32.mrb[0].mxu0
    %v1824 = vadd.f32 0.0, %v1823
    %v1825 = vpop.f32.mrb[0].mxu0
    %v1826 = vpop.f32.mrb[0].mxu0
    %v1827 = vpop.f32.mrb[0].mxu0
    %1828 = vdwg.mxu0
    %v1830 = vsel %vm394, %v1362, 0
    %v1833 = vsel %vm1371, %v385, 0
    %1835 = vmatprep.subr.bf16.mxu0 0
    %1836 = vmatpush1.bf16.msra.mxu0 %v1833
    %1837 = vmatprep.subr.bf16.mxu0 0
    %1838 = vmatpush1.bf16.msra.mxu0 0
    %1839 = vmatprep.subr.bf16.mxu0 0
    %1840 = vmatpush1.bf16.msra.mxu0 0
    %1841 = vmatprep.subr.bf16.mxu0 0
    %1842 = vmatpush1.bf16.msra.mxu0 0
    %1843 = vmatprep.subr.bf16.mxu0 0
    %1844 = vmatpush1.bf16.msra.mxu0 0
    %1845 = vmatprep.subr.bf16.mxu0 0
    %1846 = vmatpush1.bf16.msra.mxu0 0
    %1847 = vmatprep.subr.bf16.mxu0 0
    %1848 = vmatpush1.bf16.msra.mxu0 0
    %1849 = vmatprep.subr.bf16.mxu0 0
    %1850 = vmatpush1.bf16.msra.mxu0 0
    %1851 = vmatprep.subr.bf16.mxu0 0
    %1852 = vmatpush1.bf16.msra.mxu0 0
    %1853 = vmatprep.subr.bf16.mxu0 0
    %1854 = vmatpush1.bf16.msra.mxu0 0
    %1855 = vmatprep.subr.bf16.mxu0 0
    %1856 = vmatpush1.bf16.msra.mxu0 0
    %1857 = vmatprep.subr.bf16.mxu0 0
    %1858 = vmatpush1.bf16.msra.mxu0 0
    %1859 = vmatprep.subr.bf16.mxu0 0
    %1860 = vmatpush1.bf16.msra.mxu0 0
    %1861 = vmatprep.subr.bf16.mxu0 0
    %1862 = vmatpush1.bf16.msra.mxu0 0
    %1863 = vmatprep.subr.bf16.mxu0 0
    %1864 = vmatpush1.bf16.msra.mxu0 0
    %1865 = vmatprep.subr.bf16.mxu0 0
    %1866 = vmatpush1.bf16.msra.mxu0 0
    %1867 = vmatprep.mubr.bf16.mxu0 0
    %1868 = vmatmul.mubr.bf16.gmra.mrb[0].mxu0 %v1830
    %v1869 = vpop.f32.mrb[0].mxu0
    %v1870 = vadd.f32 0.0, %v1869
    %v1871 = vpop.f32.mrb[0].mxu0
    %v1872 = vpop.f32.mrb[0].mxu0
    %v1873 = vpop.f32.mrb[0].mxu0
    %1874 = vdwg.mxu0
    %v1876 = vsel %vm394, %v1363, 0
    %v1879 = vsel %vm1371, %v386, 0
    %1881 = vmatprep.subr.bf16.mxu0 0
    %1882 = vmatpush1.bf16.msra.mxu0 %v1879
    %1883 = vmatprep.subr.bf16.mxu0 0
    %1884 = vmatpush1.bf16.msra.mxu0 0
    %1885 = vmatprep.subr.bf16.mxu0 0
    %1886 = vmatpush1.bf16.msra.mxu0 0
    %1887 = vmatprep.subr.bf16.mxu0 0
    %1888 = vmatpush1.bf16.msra.mxu0 0
    %1889 = vmatprep.subr.bf16.mxu0 0
    %1890 = vmatpush1.bf16.msra.mxu0 0
    %1891 = vmatprep.subr.bf16.mxu0 0
    %1892 = vmatpush1.bf16.msra.mxu0 0
    %1893 = vmatprep.subr.bf16.mxu0 0
    %1894 = vmatpush1.bf16.msra.mxu0 0
    %1895 = vmatprep.subr.bf16.mxu0 0
    %1896 = vmatpush1.bf16.msra.mxu0 0
    %1897 = vmatprep.subr.bf16.mxu0 0
    %1898 = vmatpush1.bf16.msra.mxu0 0
    %1899 = vmatprep.subr.bf16.mxu0 0
    %1900 = vmatpush1.bf16.msra.mxu0 0
    %1901 = vmatprep.subr.bf16.mxu0 0
    %1902 = vmatpush1.bf16.msra.mxu0 0
    %1903 = vmatprep.subr.bf16.mxu0 0
    %1904 = vmatpush1.bf16.msra.mxu0 0
    %1905 = vmatprep.subr.bf16.mxu0 0
    %1906 = vmatpush1.bf16.msra.mxu0 0
    %1907 = vmatprep.subr.bf16.mxu0 0
    %1908 = vmatpush1.bf16.msra.mxu0 0
    %1909 = vmatprep.subr.bf16.mxu0 0
    %1910 = vmatpush1.bf16.msra.mxu0 0
    %1911 = vmatprep.subr.bf16.mxu0 0
    %1912 = vmatpush1.bf16.msra.mxu0 0
    %1913 = vmatprep.mubr.bf16.mxu0 0
    %1914 = vmatmul.mubr.bf16.gmra.mrb[0].mxu0 %v1876
    %v1915 = vpop.f32.mrb[0].mxu0
    %v1916 = vadd.f32 0.0, %v1915
    %v1917 = vpop.f32.mrb[0].mxu0
    %v1918 = vpop.f32.mrb[0].mxu0
    %v1919 = vpop.f32.mrb[0].mxu0
    %1920 = vdwg.mxu0
    %v1922 = vsel %vm394, %v1364, 0
    %v1925 = vsel %vm1371, %v387, 0
    %1927 = vmatprep.subr.bf16.mxu0 0
    %1928 = vmatpush1.bf16.msra.mxu0 %v1925
    %1929 = vmatprep.subr.bf16.mxu0 0
    %1930 = vmatpush1.bf16.msra.mxu0 0
    %1931 = vmatprep.subr.bf16.mxu0 0
    %1932 = vmatpush1.bf16.msra.mxu0 0
    %1933 = vmatprep.subr.bf16.mxu0 0
    %1934 = vmatpush1.bf16.msra.mxu0 0
    %1935 = vmatprep.subr.bf16.mxu0 0
    %1936 = vmatpush1.bf16.msra.mxu0 0
    %1937 = vmatprep.subr.bf16.mxu0 0
    %1938 = vmatpush1.bf16.msra.mxu0 0
    %1939 = vmatprep.subr.bf16.mxu0 0
    %1940 = vmatpush1.bf16.msra.mxu0 0
    %1941 = vmatprep.subr.bf16.mxu0 0
    %1942 = vmatpush1.bf16.msra.mxu0 0
    %1943 = vmatprep.subr.bf16.mxu0 0
    %1944 = vmatpush1.bf16.msra.mxu0 0
    %1945 = vmatprep.subr.bf16.mxu0 0
    %1946 = vmatpush1.bf16.msra.mxu0 0
    %1947 = vmatprep.subr.bf16.mxu0 0
    %1948 = vmatpush1.bf16.msra.mxu0 0
    %1949 = vmatprep.subr.bf16.mxu0 0
    %1950 = vmatpush1.bf16.msra.mxu0 0
    %1951 = vmatprep.subr.bf16.mxu0 0
    %1952 = vmatpush1.bf16.msra.mxu0 0
    %1953 = vmatprep.subr.bf16.mxu0 0
    %1954 = vmatpush1.bf16.msra.mxu0 0
    %1955 = vmatprep.subr.bf16.mxu0 0
    %1956 = vmatpush1.bf16.msra.mxu0 0
    %1957 = vmatprep.subr.bf16.mxu0 0
    %1958 = vmatpush1.bf16.msra.mxu0 0
    %1959 = vmatprep.mubr.bf16.mxu0 0
    %1960 = vmatmul.mubr.bf16.gmra.mrb[0].mxu0 %v1922
    %v1961 = vpop.f32.mrb[0].mxu0
    %v1962 = vadd.f32 0.0, %v1961
    %v1963 = vpop.f32.mrb[0].mxu0
    %v1964 = vpop.f32.mrb[0].mxu0
    %v1965 = vpop.f32.mrb[0].mxu0
    %1966 = vdwg.mxu0
    %v1968 = vsel %vm394, %v1365, 0
    %v1971 = vsel %vm1371, %v388, 0
    %1973 = vmatprep.subr.bf16.mxu0 0
    %1974 = vmatpush1.bf16.msra.mxu0 %v1971
    %1975 = vmatprep.subr.bf16.mxu0 0
    %1976 = vmatpush1.bf16.msra.mxu0 0
    %1977 = vmatprep.subr.bf16.mxu0 0
    %1978 = vmatpush1.bf16.msra.mxu0 0
    %1979 = vmatprep.subr.bf16.mxu0 0
    %1980 = vmatpush1.bf16.msra.mxu0 0
    %1981 = vmatprep.subr.bf16.mxu0 0
    %1982 = vmatpush1.bf16.msra.mxu0 0
    %1983 = vmatprep.subr.bf16.mxu0 0
    %1984 = vmatpush1.bf16.msra.mxu0 0
    %1985 = vmatprep.subr.bf16.mxu0 0
    %1986 = vmatpush1.bf16.msra.mxu0 0
    %1987 = vmatprep.subr.bf16.mxu0 0
    %1988 = vmatpush1.bf16.msra.mxu0 0
    %1989 = vmatprep.subr.bf16.mxu0 0
    %1990 = vmatpush1.bf16.msra.mxu0 0
    %1991 = vmatprep.subr.bf16.mxu0 0
    %1992 = vmatpush1.bf16.msra.mxu0 0
    %1993 = vmatprep.subr.bf16.mxu0 0
    %1994 = vmatpush1.bf16.msra.mxu0 0
    %1995 = vmatprep.subr.bf16.mxu0 0
    %1996 = vmatpush1.bf16.msra.mxu0 0
    %1997 = vmatprep.subr.bf16.mxu0 0
    %1998 = vmatpush1.bf16.msra.mxu0 0
    %1999 = vmatprep.subr.bf16.mxu0 0
    %2000 = vmatpush1.bf16.msra.mxu0 0
    %2001 = vmatprep.subr.bf16.mxu0 0
    %2002 = vmatpush1.bf16.msra.mxu0 0
    %2003 = vmatprep.subr.bf16.mxu0 0
    %2004 = vmatpush1.bf16.msra.mxu0 0
    %2005 = vmatprep.mubr.bf16.mxu0 0
    %2006 = vmatmul.mubr.bf16.gmra.mrb[0].mxu0 %v1968
    %v2007 = vpop.f32.mrb[0].mxu0
    %v2008 = vadd.f32 0.0, %v2007
    %v2009 = vpop.f32.mrb[0].mxu0
    %v2010 = vpop.f32.mrb[0].mxu0
    %v2011 = vpop.f32.mrb[0].mxu0
    %2012 = vdwg.mxu0
    %v2014 = vsel %vm394, %v1366, 0
    %v2017 = vsel %vm1371, %v389, 0
    %2019 = vmatprep.subr.bf16.mxu0 0
    %2020 = vmatpush1.bf16.msra.mxu0 %v2017
    %2021 = vmatprep.subr.bf16.mxu0 0
    %2022 = vmatpush1.bf16.msra.mxu0 0
    %2023 = vmatprep.subr.bf16.mxu0 0
    %2024 = vmatpush1.bf16.msra.mxu0 0
    %2025 = vmatprep.subr.bf16.mxu0 0
    %2026 = vmatpush1.bf16.msra.mxu0 0
    %2027 = vmatprep.subr.bf16.mxu0 0
    %2028 = vmatpush1.bf16.msra.mxu0 0
    %2029 = vmatprep.subr.bf16.mxu0 0
    %2030 = vmatpush1.bf16.msra.mxu0 0
    %2031 = vmatprep.subr.bf16.mxu0 0
    %2032 = vmatpush1.bf16.msra.mxu0 0
    %2033 = vmatprep.subr.bf16.mxu0 0
    %2034 = vmatpush1.bf16.msra.mxu0 0
    %2035 = vmatprep.subr.bf16.mxu0 0
    %2036 = vmatpush1.bf16.msra.mxu0 0
    %2037 = vmatprep.subr.bf16.mxu0 0
    %2038 = vmatpush1.bf16.msra.mxu0 0
    %2039 = vmatprep.subr.bf16.mxu0 0
    %2040 = vmatpush1.bf16.msra.mxu0 0
    %2041 = vmatprep.subr.bf16.mxu0 0
    %2042 = vmatpush1.bf16.msra.mxu0 0
    %2043 = vmatprep.subr.bf16.mxu0 0
    %2044 = vmatpush1.bf16.msra.mxu0 0
    %2045 = vmatprep.subr.bf16.mxu0 0
    %2046 = vmatpush1.bf16.msra.mxu0 0
    %2047 = vmatprep.subr.bf16.mxu0 0
    %2048 = vmatpush1.bf16.msra.mxu0 0
    %2049 = vmatprep.subr.bf16.mxu0 0
    %2050 = vmatpush1.bf16.msra.mxu0 0
    %2051 = vmatprep.mubr.bf16.mxu0 0
    %2052 = vmatmul.mubr.bf16.gmra.mrb[0].mxu0 %v2014
    %v2053 = vpop.f32.mrb[0].mxu0
    %v2054 = vadd.f32 0.0, %v2053
    %v2055 = vpop.f32.mrb[0].mxu0
    %v2056 = vpop.f32.mrb[0].mxu0
    %v2057 = vpop.f32.mrb[0].mxu0
    %2058 = vdwg.mxu0
    %v2060 = vsel %vm394, %v1367, 0
    %v2063 = vsel %vm1371, %v390, 0
    %2065 = vmatprep.subr.bf16.mxu0 0
    %2066 = vmatpush1.bf16.msra.mxu0 %v2063
    %2067 = vmatprep.subr.bf16.mxu0 0
    %2068 = vmatpush1.bf16.msra.mxu0 0
    %2069 = vmatprep.subr.bf16.mxu0 0
    %2070 = vmatpush1.bf16.msra.mxu0 0
    %2071 = vmatprep.subr.bf16.mxu0 0
    %2072 = vmatpush1.bf16.msra.mxu0 0
    %2073 = vmatprep.subr.bf16.mxu0 0
    %2074 = vmatpush1.bf16.msra.mxu0 0
    %2075 = vmatprep.subr.bf16.mxu0 0
    %2076 = vmatpush1.bf16.msra.mxu0 0
    %2077 = vmatprep.subr.bf16.mxu0 0
    %2078 = vmatpush1.bf16.msra.mxu0 0
    %2079 = vmatprep.subr.bf16.mxu0 0
    %2080 = vmatpush1.bf16.msra.mxu0 0
    %2081 = vmatprep.subr.bf16.mxu0 0
    %2082 = vmatpush1.bf16.msra.mxu0 0
    %2083 = vmatprep.subr.bf16.mxu0 0
    %2084 = vmatpush1.bf16.msra.mxu0 0
    %2085 = vmatprep.subr.bf16.mxu0 0
    %2086 = vmatpush1.bf16.msra.mxu0 0
    %2087 = vmatprep.subr.bf16.mxu0 0
    %2088 = vmatpush1.bf16.msra.mxu0 0
    %2089 = vmatprep.subr.bf16.mxu0 0
    %2090 = vmatpush1.bf16.msra.mxu0 0
    %2091 = vmatprep.subr.bf16.mxu0 0
    %2092 = vmatpush1.bf16.msra.mxu0 0
    %2093 = vmatprep.subr.bf16.mxu0 0
    %2094 = vmatpush1.bf16.msra.mxu0 0
    %2095 = vmatprep.subr.bf16.mxu0 0
    %2096 = vmatpush1.bf16.msra.mxu0 0
    %2097 = vmatprep.mubr.bf16.mxu0 0
    %2098 = vmatmul.mubr.bf16.gmra.mrb[0].mxu0 %v2060
    %v2099 = vpop.f32.mrb[0].mxu0
    %v2100 = vadd.f32 0.0, %v2099
    %v2101 = vpop.f32.mrb[0].mxu0
    %v2102 = vpop.f32.mrb[0].mxu0
    %v2103 = vpop.f32.mrb[0].mxu0
    %2104 = vdwg.mxu0
    %2107 = vrot.lane.b32.xlu0 %v1502, 8
    %v2108 = vpop.permute.xlu0 %2107
    %2109 = vrot.lane.b32.xlu0 %v1548, 8
    %v2110 = vpop.permute.xlu0 %2109
    %2115 = vrot.lane.b32.xlu0 %v1594, 16
    %v2116 = vpop.permute.xlu0 %2115
    %2117 = vrot.lane.b32.xlu0 %v1640, 16
    %v2118 = vpop.permute.xlu0 %2117
    %2123 = vrot.lane.b32.xlu0 %v1686, 24
    %v2124 = vpop.permute.xlu0 %2123
    %2125 = vrot.lane.b32.xlu0 %v1732, 24
    %v2126 = vpop.permute.xlu0 %2125
    %2131 = vrot.lane.b32.xlu0 %v1778, 32
    %v2132 = vpop.permute.xlu0 %2131
    %2133 = vrot.lane.b32.xlu0 %v1824, 32
    %v2134 = vpop.permute.xlu0 %2133
    %2139 = vrot.lane.b32.xlu0 %v1870, 40
    %v2140 = vpop.permute.xlu0 %2139
    %2141 = vrot.lane.b32.xlu0 %v1916, 40
    %v2142 = vpop.permute.xlu0 %2141
    %2147 = vrot.lane.b32.xlu0 %v1962, 48
    %v2148 = vpop.permute.xlu0 %2147
    %2149 = vrot.lane.b32.xlu0 %v2008, 48
    %v2150 = vpop.permute.xlu0 %2149
    %2155 = vrot.lane.b32.xlu0 %v2054, 56
    %v2156 = vpop.permute.xlu0 %2155
    %2157 = vrot.lane.b32.xlu0 %v2100, 56
    %v2158 = vpop.permute.xlu0 %2157
    %v2161 = vsel %vm394, %v1410, %v2108
    %v2162 = vsel %vm394, %v1456, %v2110
    %vm2163 = vcmask 130048
    %v2164 = vsel %vm2163, %v2161, %v2116
    %v2165 = vsel %vm2163, %v2162, %v2118
    %vm2166 = vcmask 195584
    %v2167 = vsel %vm2166, %v2164, %v2124
    %v2168 = vsel %vm2166, %v2165, %v2126
    %vm2169 = vcmask 261120
    %v2170 = vsel %vm2169, %v2167, %v2132
    %v2171 = vsel %vm2169, %v2168, %v2134
    %vm2172 = vcmask 326656
    %v2173 = vsel %vm2172, %v2170, %v2140
    %v2174 = vsel %vm2172, %v2171, %v2142
    %vm2175 = vcmask 392192
    %v2176 = vsel %vm2175, %v2173, %v2148
    %v2177 = vsel %vm2175, %v2174, %v2150
    %vm2178 = vcmask 457728
    %v2179 = vsel %vm2178, %v2176, %v2156
    %v2180 = vsel %vm2178, %v2177, %v2158
    %v2181 = vpack.c.bf16 %v2180, %v2179
    %v2182 = vld [vmem:[#allocation7] sm:$0xf]
    %v2183 = vld [vmem:[#allocation7 + $0x4] sm:$0xf]
    %v2184 = vld [vmem:[#allocation7 + $0x8] sm:$0xf]
    %v2185 = vld [vmem:[#allocation7 + $0xc] sm:$0xf]
    %v2186 = vld [vmem:[#allocation7 + $0x10] sm:$0xf]
    %v2187 = vld [vmem:[#allocation7 + $0x14] sm:$0xf]
    %v2188 = vld [vmem:[#allocation7 + $0x18] sm:$0xf]
    %v2189 = vld [vmem:[#allocation7 + $0x1c] sm:$0xf]
    %v2190 = vld [vmem:[%s4] sm:$0x1]
    %v2192 = vlaneseq
    %v2193 = vshrl.u32 %v2192, 7
    %v2194 = vsub.s32 0, %v2193
    %v2195 = vrot.slane %v2190, %v2194
    %v2205 = vunpack.c.l.b16 %v2182
    %v2206 = vunpack.c.l.b16 %v2183
    %v2207 = vunpack.c.l.b16 %v2184
    %v2208 = vunpack.c.l.b16 %v2185
    %v2209 = vunpack.c.l.b16 %v2186
    %v2210 = vunpack.c.l.b16 %v2187
    %v2211 = vunpack.c.l.b16 %v2188
    %v2212 = vunpack.c.l.b16 %v2189
    %v2213 = vpack.c.b16 %v2206, %v2205
    %v2214 = vpack.c.b16 %v2208, %v2207
    %v2215 = vpack.c.b16 %v2210, %v2209
    %v2216 = vpack.c.b16 %v2212, %v2211
    %v2222 = vsel %vm104, %v2181, 0
    %2224 = vmatprep.subr.bf16.mxu0 0
    %2225 = vmatpush1.bf16.msra.mxu0 %v2213
    %2226 = vmatprep.subr.bf16.mxu0 0
    %2227 = vmatpush1.bf16.msra.mxu0 %v2214
    %2228 = vmatprep.subr.bf16.mxu0 0
    %2229 = vmatpush1.bf16.msra.mxu0 %v2215
    %2230 = vmatprep.subr.bf16.mxu0 0
    %2231 = vmatpush1.bf16.msra.mxu0 %v2216
    %2232 = vmatprep.subr.bf16.mxu0 0
    %2233 = vmatpush1.bf16.msra.mxu0 0
    %2234 = vmatprep.subr.bf16.mxu0 0
    %2235 = vmatpush1.bf16.msra.mxu0 0
    %2236 = vmatprep.subr.bf16.mxu0 0
    %2237 = vmatpush1.bf16.msra.mxu0 0
    %2238 = vmatprep.subr.bf16.mxu0 0
    %2239 = vmatpush1.bf16.msra.mxu0 0
    %2240 = vmatprep.subr.bf16.mxu0 0
    %2241 = vmatpush1.bf16.msra.mxu0 0
    %2242 = vmatprep.subr.bf16.mxu0 0
    %2243 = vmatpush1.bf16.msra.mxu0 0
    %2244 = vmatprep.subr.bf16.mxu0 0
    %2245 = vmatpush1.bf16.msra.mxu0 0
    %2246 = vmatprep.subr.bf16.mxu0 0
    %2247 = vmatpush1.bf16.msra.mxu0 0
    %2248 = vmatprep.subr.bf16.mxu0 0
    %2249 = vmatpush1.bf16.msra.mxu0 0
    %2250 = vmatprep.subr.bf16.mxu0 0
    %2251 = vmatpush1.bf16.msra.mxu0 0
    %2252 = vmatprep.subr.bf16.mxu0 0
    %2253 = vmatpush1.bf16.msra.mxu0 0
    %2254 = vmatprep.subr.bf16.mxu0 0
    %2255 = vmatpush1.bf16.msra.mxu0 0
    %2256 = vmatprep.mubr.bf16.mxu0 0
    %2257 = vmatmul.mubr.bf16.gmra.mrb[0].mxu0 %v2222
    %v2258 = vpop.f32.mrb[0].mxu0
    %v2259 = vadd.f32 %v2195, %v2258
    %v2260 = vpop.f32.mrb[0].mxu0
    %v2261 = vpop.f32.mrb[0].mxu0
    %v2262 = vadd.f32 %v2195, %v2261
    %v2263 = vpop.f32.mrb[0].mxu0
    %2264 = vdwg.mxu0
    %v2265 = vadd.f32 %v102, %v2259
    %v2266 = vadd.f32 %v103, %v2262
    %v2267 = vsel %vm104, %v2265, 0.0
    %2268 = vadd.xlane.f32.xlu0 %v2267
    %v2269 = vpop.xlane.xlu0 %2268
    %v2270 = vsel %vm104, %v2266, 0.0
    %2271 = vadd.xlane.f32.xlu0 %v2270
    %v2272 = vpop.xlane.xlu0 %2271
    %v2273 = vmul.f32 %v2269, %v111
    %v2274 = vmul.f32 %v2272, %v111
    %v2275 = vsub.f32 %v2265, %v2273
    %v2276 = vsub.f32 %v2266, %v2274
    %v2277 = vmul.f32 %v2275, %v2275
    %v2278 = vmul.f32 %v2276, %v2276
    %v2279 = vsel %vm104, %v2277, 0.0
    %2280 = vadd.xlane.f32.xlu0 %v2279
    %v2281 = vpop.xlane.xlu0 %2280
    %v2282 = vsel %vm104, %v2278, 0.0
    %2283 = vadd.xlane.f32.xlu0 %v2282
    %v2284 = vpop.xlane.xlu0 %2283
    %v2285 = vmul.f32 %v2281, %v111
    %v2286 = vmul.f32 %v2284, %v111
    %v2287 = vadd.f32 %v2285, 1e-05
    %v2288 = vadd.f32 %v2286, 1e-05
    %v2289 = vrsqrt.pop %v2287
    %v2290 = vrsqrt.pop %v2288
    %v2291 = vmul.f32 %v2275, %v2289
    %v2292 = vmul.f32 %v2276, %v2290
    %v2293 = vpack.c.bf16 %v2292, %v2291
    %v2294 = vld [vmem:[#allocation8] sm:$0xf]
    %v2295 = vld [vmem:[#allocation8 + $0x4] sm:$0xf]
    %v2296 = vld [vmem:[#allocation8 + $0x8] sm:$0xf]
    %v2297 = vld [vmem:[#allocation8 + $0xc] sm:$0xf]
    %v2298 = vld [vmem:[#allocation8 + $0x10] sm:$0xf]
    %v2299 = vld [vmem:[#allocation8 + $0x14] sm:$0xf]
    %v2300 = vld [vmem:[#allocation8 + $0x18] sm:$0xf]
    %v2301 = vld [vmem:[#allocation8 + $0x1c] sm:$0xf]
    %v2302 = vld [vmem:[%s6] sm:$0x1]
    %v2304 = vlaneseq
    %v2305 = vshrl.u32 %v2304, 7
    %v2306 = vsub.s32 0, %v2305
    %v2307 = vrot.slane %v2302, %v2306
    %v2317 = vunpack.c.l.b16 %v2294
    %v2318 = vunpack.c.l.b16 %v2295
    %v2319 = vunpack.c.l.b16 %v2296
    %v2320 = vunpack.c.l.b16 %v2297
    %v2321 = vunpack.c.l.b16 %v2298
    %v2322 = vunpack.c.l.b16 %v2299
    %v2323 = vunpack.c.l.b16 %v2300
    %v2324 = vunpack.c.l.b16 %v2301
    %v2325 = vpack.c.b16 %v2318, %v2317
    %v2326 = vpack.c.b16 %v2320, %v2319
    %v2327 = vpack.c.b16 %v2322, %v2321
    %v2328 = vpack.c.b16 %v2324, %v2323
    %v2334 = vsel %vm104, %v2293, 0
    %2336 = vmatprep.subr.bf16.mxu0 0
    %2337 = vmatpush1.bf16.msra.mxu0 %v2325
    %2338 = vmatprep.subr.bf16.mxu0 0
    %2339 = vmatpush1.bf16.msra.mxu0 %v2326
    %2340 = vmatprep.subr.bf16.mxu0 0
    %2341 = vmatpush1.bf16.msra.mxu0 %v2327
    %2342 = vmatprep.subr.bf16.mxu0 0
    %2343 = vmatpush1.bf16.msra.mxu0 %v2328
    %2344 = vmatprep.subr.bf16.mxu0 0
    %2345 = vmatpush1.bf16.msra.mxu0 0
    %2346 = vmatprep.subr.bf16.mxu0 0
    %2347 = vmatpush1.bf16.msra.mxu0 0
    %2348 = vmatprep.subr.bf16.mxu0 0
    %2349 = vmatpush1.bf16.msra.mxu0 0
    %2350 = vmatprep.subr.bf16.mxu0 0
    %2351 = vmatpush1.bf16.msra.mxu0 0
    %2352 = vmatprep.subr.bf16.mxu0 0
    %2353 = vmatpush1.bf16.msra.mxu0 0
    %2354 = vmatprep.subr.bf16.mxu0 0
    %2355 = vmatpush1.bf16.msra.mxu0 0
    %2356 = vmatprep.subr.bf16.mxu0 0
    %2357 = vmatpush1.bf16.msra.mxu0 0
    %2358 = vmatprep.subr.bf16.mxu0 0
    %2359 = vmatpush1.bf16.msra.mxu0 0
    %2360 = vmatprep.subr.bf16.mxu0 0
    %2361 = vmatpush1.bf16.msra.mxu0 0
    %2362 = vmatprep.subr.bf16.mxu0 0
    %2363 = vmatpush1.bf16.msra.mxu0 0
    %2364 = vmatprep.subr.bf16.mxu0 0
    %2365 = vmatpush1.bf16.msra.mxu0 0
    %2366 = vmatprep.subr.bf16.mxu0 0
    %2367 = vmatpush1.bf16.msra.mxu0 0
    %2368 = vmatprep.mubr.bf16.mxu0 0
    %2369 = vmatmul.mubr.bf16.gmra.mrb[0].mxu0 %v2334
    %v2370 = vpop.f32.mrb[0].mxu0
    %v2371 = vadd.f32 %v2307, %v2370
    %v2372 = vpop.f32.mrb[0].mxu0
    %v2373 = vpop.f32.mrb[0].mxu0
    %v2374 = vadd.f32 %v2307, %v2373
    %v2375 = vpop.f32.mrb[0].mxu0
    %2376 = vdwg.mxu0
    %v2377 = vmul.f32 %v2371, 0.5
    %v2378 = vmul.f32 %v2374, 0.5
    %v2379 = vmul.f32 %v2371, 0.70710677
    %v2380 = vmul.f32 %v2374, 0.70710677
    %v2381 = verf.f32.pop %v2379
    %v2382 = verf.f32.pop %v2380
    %v2383 = vadd.f32 %v2381, 1.0
    %v2384 = vadd.f32 %v2382, 1.0
    %v2385 = vmul.f32 %v2377, %v2383
    %v2386 = vmul.f32 %v2378, %v2384
    %v2387 = vpack.c.bf16 %v2386, %v2385
    %v2388 = vld [vmem:[#allocation10] sm:$0xf]
    %v2389 = vld [vmem:[#allocation10 + $0x4] sm:$0xf]
    %v2390 = vld [vmem:[#allocation10 + $0x8] sm:$0xf]
    %v2391 = vld [vmem:[#allocation10 + $0xc] sm:$0xf]
    %v2392 = vld [vmem:[#allocation10 + $0x10] sm:$0xf]
    %v2393 = vld [vmem:[#allocation10 + $0x14] sm:$0xf]
    %v2394 = vld [vmem:[#allocation10 + $0x18] sm:$0xf]
    %v2395 = vld [vmem:[#allocation10 + $0x1c] sm:$0xf]
    %v2396 = vld [vmem:[%s8] sm:$0x1]
    %v2398 = vlaneseq
    %v2399 = vshrl.u32 %v2398, 7
    %v2400 = vsub.s32 0, %v2399
    %v2401 = vrot.slane %v2396, %v2400
    %v2411 = vunpack.c.l.b16 %v2388
    %v2412 = vunpack.c.l.b16 %v2389
    %v2413 = vunpack.c.l.b16 %v2390
    %v2414 = vunpack.c.l.b16 %v2391
    %v2415 = vunpack.c.l.b16 %v2392
    %v2416 = vunpack.c.l.b16 %v2393
    %v2417 = vunpack.c.l.b16 %v2394
    %v2418 = vunpack.c.l.b16 %v2395
    %v2419 = vpack.c.b16 %v2412, %v2411
    %v2420 = vpack.c.b16 %v2414, %v2413
    %v2421 = vpack.c.b16 %v2416, %v2415
    %v2422 = vpack.c.b16 %v2418, %v2417
    %v2428 = vsel %vm104, %v2387, 0
    %2430 = vmatprep.subr.bf16.mxu0 0
    %2431 = vmatpush1.bf16.msra.mxu0 %v2419
    %2432 = vmatprep.subr.bf16.mxu0 0
    %2433 = vmatpush1.bf16.msra.mxu0 %v2420
    %2434 = vmatprep.subr.bf16.mxu0 0
    %2435 = vmatpush1.bf16.msra.mxu0 %v2421
    %2436 = vmatprep.subr.bf16.mxu0 0
    %2437 = vmatpush1.bf16.msra.mxu0 %v2422
    %2438 = vmatprep.subr.bf16.mxu0 0
    %2439 = vmatpush1.bf16.msra.mxu0 0
    %2440 = vmatprep.subr.bf16.mxu0 0
    %2441 = vmatpush1.bf16.msra.mxu0 0
    %2442 = vmatprep.subr.bf16.mxu0 0
    %2443 = vmatpush1.bf16.msra.mxu0 0
    %2444 = vmatprep.subr.bf16.mxu0 0
    %2445 = vmatpush1.bf16.msra.mxu0 0
    %2446 = vmatprep.subr.bf16.mxu0 0
    %2447 = vmatpush1.bf16.msra.mxu0 0
    %2448 = vmatprep.subr.bf16.mxu0 0
    %2449 = vmatpush1.bf16.msra.mxu0 0
    %2450 = vmatprep.subr.bf16.mxu0 0
    %2451 = vmatpush1.bf16.msra.mxu0 0
    %2452 = vmatprep.subr.bf16.mxu0 0
    %2453 = vmatpush1.bf16.msra.mxu0 0
    %2454 = vmatprep.subr.bf16.mxu0 0
    %2455 = vmatpush1.bf16.msra.mxu0 0
    %2456 = vmatprep.subr.bf16.mxu0 0
    %2457 = vmatpush1.bf16.msra.mxu0 0
    %2458 = vmatprep.subr.bf16.mxu0 0
    %2459 = vmatpush1.bf16.msra.mxu0 0
    %2460 = vmatprep.subr.bf16.mxu0 0
    %2461 = vmatpush1.bf16.msra.mxu0 0
    %2462 = vmatprep.mubr.bf16.mxu0 0
    %2463 = vmatmul.mubr.bf16.gmra.mrb[0].mxu0 %v2428
    %v2464 = vpop.f32.mrb[0].mxu0
    %v2465 = vadd.f32 %v2401, %v2464
    %v2466 = vpop.f32.mrb[0].mxu0
    %v2467 = vpop.f32.mrb[0].mxu0
    %v2468 = vadd.f32 %v2401, %v2467
    %v2469 = vpop.f32.mrb[0].mxu0
    %2470 = vdwg.mxu0
    %v2471 = vadd.f32 %v2265, %v2465
    %v2472 = vadd.f32 %v2266, %v2468
    %2473 = vst.msk [vmem:[#allocation11] sm:$0xff] %vm104, %v2471
    %2474 = vst.msk [vmem:[#allocation11 + $0x8] sm:$0xff] %vm104, %v2472
    // Predicated region
    $region58: #{tpu_custom_call.1} parent=1 // pred_check
      _
    $region59: #{tpu_custom_call.1} parent=1 // pred_check_branch
      %2476 = sbr.rel (0) target = $region61
    $region60: #{tpu_custom_call.1} parent=1 // pred_region
      %s2478 = ssub.s32 256, 256
      %2479 = vsyncadd [#allocation4], %s2478
      %s2480 = sshll.u32 [#allocation11], 4
      %s2481 = int_to_ptr.vmem [resolvable:$true] %s2480
      %2486 = dma.vmem_to_hbm [thread:$0]  %s2481, 256, %s9, [#allocation4], 128, 128, 8
    $region61: #{tpu_custom_call.1} parent=1 // pred_fallthru
      _
    // Predicated region
    $region62: #{tpu_custom_call.1} parent=1 // pred_check
      _
    $region63: #{tpu_custom_call.1} parent=1 // pred_check_branch
      %2488 = sbr.rel (0) target = $region65
    $region64: #{tpu_custom_call.1} parent=1 // pred_region
      %2489 = dma.done [#allocation4], 256
    $region65: #{tpu_custom_call.1} parent=1 // pred_fallthru
      _
    %2490 = vsyncpa [#allocation3], 1
    %2491 = vsyncpa [#allocation6], 1
    %2492 = vsyncpa [#allocation9], 1
    %2493 = vsyncpa [#allocation4], 1

</llo_original>
